<compile_context>
chip_gen: v7x
topology: tpu7x:2x2x1
jax: 0.10.0
libtpu: 0.0.40
codegen_flags: <defaults>
</compile_context>

<pallas_src>
import math

import jax
import jax.numpy as jnp
from jax import lax
from jax.experimental import pallas as pl
from jax.experimental.pallas import tpu as pltpu

NUM_L = 5                  # Legendre polynomials unrolled up to l = NUM_L-1 = 4
OUT_DIM = NUM_L * NUM_L    # 25
IN_DIM = 6                 # edge_attr columns 1:7 (two endpoint positions)


def _norm_const(l, m_abs):
    """Normalization used by SphericalHarmonics.get_element (Condon-Shortley lpmv)."""
    n = math.sqrt((2 * l + 1) / (4.0 * math.pi))
    if m_abs != 0:
        n *= math.sqrt(2.0 * math.factorial(l - m_abs) / math.factorial(l + m_abs))
    return float(n)


def _harmonic_columns(ct, st, cphi, sphi):
    """Return the 25 tesseral-harmonic arrays (ordered l=0..4, m=-l..l).

    ct, st     : cos(theta), sin(theta)  (sin(theta) >= 0), any broadcastable shape
    cphi, sphi : lists of length 4, cphi[m-1] = cos(m*phi), sphi[m-1] = sin(m*phi)
    """
    ct2 = ct * ct; ct3 = ct2 * ct; ct4 = ct3 * ct
    st2 = st * st; st3 = st2 * st; st4 = st3 * st
    one = jnp.ones_like(ct)

    # Associated Legendre P_l^m(cos theta), Condon-Shortley phase included.
    P = {
        (0, 0): one,
        (1, 0): ct,
        (1, 1): -st,
        (2, 0): 0.5 * (3.0 * ct2 - 1.0),
        (2, 1): -3.0 * ct * st,
        (2, 2): 3.0 * st2,
        (3, 0): 0.5 * (5.0 * ct3 - 3.0 * ct),
        (3, 1): -1.5 * (5.0 * ct2 - 1.0) * st,
        (3, 2): 15.0 * ct * st2,
        (3, 3): -15.0 * st3,
        (4, 0): 0.125 * (35.0 * ct4 - 30.0 * ct2 + 3.0),
        (4, 1): -2.5 * (7.0 * ct3 - 3.0 * ct) * st,
        (4, 2): 7.5 * (7.0 * ct2 - 1.0) * st2,
        (4, 3): -105.0 * ct * st3,
        (4, 4): 105.0 * st4,
    }

    cols = []
    for l in range(NUM_L):
        for m in range(-l, l + 1):
            am = abs(m)
            n = _norm_const(l, am)
            if m == 0:
                cols.append(n * P[(l, 0)])
            elif m > 0:
                cols.append(n * cphi[m - 1] * P[(l, m)])
            else:
                cols.append(n * sphi[am - 1] * P[(l, am)])
    return cols


def _sph_kernel(e_ref, o_ref):
    # e_ref: (6, TILE_E)  rows = edge_attr columns 1..6, edges on the lane axis
    # o_ref: (25, TILE_E) rows = the 25 harmonics
    ea = e_ref[...]

    # r_vec = edge_attr[:,1:4] - edge_attr[:,4:7]
    # axis convention from get_spherical_from_cartesian:
    #   cartesian_z = r_vec[...,0], cartesian_x = r_vec[...,1], cartesian_y = r_vec[...,2]
    z = ea[0:1, :] - ea[3:4, :]
    x = ea[1:2, :] - ea[4:5, :]
    y = ea[2:3, :] - ea[5:6, :]

    r_xy = x * x + y * y
    r_sq = r_xy + z * z

    has_r = r_sq > 0.0
    has_rho = r_xy > 0.0

    # rsqrt on the EUP (its own bundle slot); guards match atan2(0,0) = 0.
    inv_r = lax.rsqrt(jnp.where(has_r, r_sq, 1.0))
    inv_rho = lax.rsqrt(jnp.where(has_rho, r_xy, 1.0))

    ct = jnp.where(has_r, z * inv_r, 1.0)                # cos(theta)
    st = jnp.where(has_r, r_xy * inv_rho * inv_r, 0.0)   # sin(theta) = rho/r >= 0
    c1 = jnp.where(has_rho, x * inv_rho, 1.0)            # cos(phi)
    s1 = jnp.where(has_rho, y * inv_rho, 0.0)            # sin(phi)

    # cos(m*phi), sin(m*phi) via angle-addition recurrence (m = 2..4)
    c2 = c1 * c1 - s1 * s1; s2 = 2.0 * s1 * c1
    c3 = c2 * c1 - s2 * s1; s3 = s2 * c1 + c2 * s1
    c4 = c3 * c1 - s3 * s1; s4 = s3 * c1 + c3 * s1

    cols = _harmonic_columns(ct, st, [c1, c2, c3, c4], [s1, s2, s3, s4])
    # Direct, lane-dense row stores — no in-kernel concat.
    for k, col in enumerate(cols):
        o_ref[k:k + 1, :] = col


def spherical_harmonics_basis(edge_attr, *, tile_e=2048):
    """Pallas forward of SphericalHarmonicsBasis (num_l=5).

    edge_attr: [E, C>=7] float array; returns [E, 25] float32.
    """
    edge_attr = jnp.asarray(edge_attr, jnp.float32)
    E, C = edge_attr.shape
    assert C >= 7, "edge_attr must have at least 7 feature columns"

    # Only the 6 columns the op actually reads, edges moved to the lane axis.
    ea_t = edge_attr[:, 1:7].T  # [6, E]

    # Tile size: multiple of 128 lanes, large by default, clipped for tiny E.
    e_round = pl.cdiv(E, 128) * 128
    tile = max(128, min((tile_e // 128) * 128, e_round))
    n_blocks = pl.cdiv(E, tile)
    E_pad = n_blocks * tile
    if E_pad != E:
        # zero-padded edges are handled safely by the in-kernel where-guards
        ea_t = jnp.pad(ea_t, ((0, 0), (0, E_pad - E)))

    out_t = pl.pallas_call(
        _sph_kernel,
        out_shape=jax.ShapeDtypeStruct((OUT_DIM, E_pad), jnp.float32),
        grid=(n_blocks,),
        in_specs=[pl.BlockSpec((IN_DIM, tile), lambda i: (0, i))],
        out_specs=pl.BlockSpec((OUT_DIM, tile), lambda i: (0, i)),
        compiler_params=pltpu.CompilerParams(dimension_semantics=("parallel",)),
    )(ea_t)

    return out_t[:, :E].T  # [E, 25]


def spherical_harmonics_basis_reference(edge_attr):
    """Pure-JAX reference mirroring the PyTorch forward (atan2 + cos/sin path)."""
    ea = jnp.asarray(edge_attr, jnp.float32)
    r_vec = ea[:, 1:4] - ea[:, 4:7]
    z = r_vec[:, 0:1]
    x = r_vec[:, 1:2]
    y = r_vec[:, 2:3]
    theta = jnp.arctan2(jnp.sqrt(x * x + y * y), z)
    phi = jnp.arctan2(y, x)
    ct, st = jnp.cos(theta), jnp.sin(theta)
    cphi = [jnp.cos(m * phi) for m in range(1, NUM_L)]
    sphi = [jnp.sin(m * phi) for m in range(1, NUM_L)]
    cols = _harmonic_columns(ct, st, cphi, sphi)
    return jnp.concatenate(cols, axis=-1)


if __name__ == "__main__":
    key = jax.random.PRNGKey(0)
    E, C = 512, 7  # small synthetic edge set; columns 1:7 hold the two endpoint positions
    edge_attr = jax.random.normal(key, (E, C), dtype=jnp.float32)

    out = spherical_harmonics_basis(edge_attr)
    out = jax.block_until_ready(out)

    ref = spherical_harmonics_basis_reference(edge_attr)
    assert out.shape == (E, OUT_DIM), out.shape
    max_err = float(jnp.max(jnp.abs(out - ref)))
    assert max_err < 1e-4, f"max abs error {max_err}"

    print("KERNEL_OK")
</pallas_src>

<mosaic_0001>
module attributes {stable_mosaic.version = 11 : i64} {
  func.func @_sph_kernel(%arg0: i32, %arg1: memref<6x512xf32, #tpu.memory_space<vmem>>, %arg2: memref<25x512xf32, #tpu.memory_space<vmem>>) attributes {dimension_semantics = [#tpu.dimension_semantics<parallel>], iteration_bounds = array<i64: 1>, scalar_prefetch = 0 : i64, scratch_operands = 0 : i64, tpu.core_type = #tpu.core_type<tc>, window_params = [{transform_indices = @transform_0, window_bounds = array<i64: 6, 512>}, {transform_indices = @transform_1, window_bounds = array<i64: 25, 512>}]} {
    %c0 = arith.constant 0 : index
    %c0_0 = arith.constant 0 : index
    %0 = vector.load %arg1[%c0, %c0_0] : memref<6x512xf32, #tpu.memory_space<vmem>>, vector<6x512xf32>
    %1 = vector.extract_strided_slice %0 {offsets = [0, 0], sizes = [1, 512], strides = [1, 1]} : vector<6x512xf32> to vector<1x512xf32>
    %2 = vector.extract_strided_slice %0 {offsets = [3, 0], sizes = [1, 512], strides = [1, 1]} : vector<6x512xf32> to vector<1x512xf32>
    %3 = arith.subf %1, %2 : vector<1x512xf32>
    %4 = vector.extract_strided_slice %0 {offsets = [1, 0], sizes = [1, 512], strides = [1, 1]} : vector<6x512xf32> to vector<1x512xf32>
    %5 = vector.extract_strided_slice %0 {offsets = [4, 0], sizes = [1, 512], strides = [1, 1]} : vector<6x512xf32> to vector<1x512xf32>
    %6 = arith.subf %4, %5 : vector<1x512xf32>
    %7 = vector.extract_strided_slice %0 {offsets = [2, 0], sizes = [1, 512], strides = [1, 1]} : vector<6x512xf32> to vector<1x512xf32>
    %8 = vector.extract_strided_slice %0 {offsets = [5, 0], sizes = [1, 512], strides = [1, 1]} : vector<6x512xf32> to vector<1x512xf32>
    %9 = arith.subf %7, %8 : vector<1x512xf32>
    %10 = arith.mulf %6, %6 : vector<1x512xf32>
    %11 = arith.mulf %9, %9 : vector<1x512xf32>
    %12 = arith.addf %10, %11 : vector<1x512xf32>
    %13 = arith.mulf %3, %3 : vector<1x512xf32>
    %14 = arith.addf %12, %13 : vector<1x512xf32>
    %cst = arith.constant 0.000000e+00 : f32
    %15 = vector.broadcast %cst : f32 to vector<1x512xf32>
    %16 = arith.cmpf ogt, %14, %15 : vector<1x512xf32>
    %cst_1 = arith.constant 0.000000e+00 : f32
    %17 = vector.broadcast %cst_1 : f32 to vector<1x512xf32>
    %18 = arith.cmpf ogt, %12, %17 : vector<1x512xf32>
    %cst_2 = arith.constant 1.000000e+00 : f32
    %19 = vector.broadcast %cst_2 : f32 to vector<1x512xf32>
    %20 = arith.select %16, %14, %19 : vector<1x512xi1>, vector<1x512xf32>
    %21 = math.rsqrt %20 : vector<1x512xf32>
    %cst_3 = arith.constant 1.000000e+00 : f32
    %22 = vector.broadcast %cst_3 : f32 to vector<1x512xf32>
    %23 = arith.select %18, %12, %22 : vector<1x512xi1>, vector<1x512xf32>
    %24 = math.rsqrt %23 : vector<1x512xf32>
    %25 = arith.mulf %3, %21 : vector<1x512xf32>
    %cst_4 = arith.constant 1.000000e+00 : f32
    %26 = vector.broadcast %cst_4 : f32 to vector<1x512xf32>
    %27 = arith.select %16, %25, %26 : vector<1x512xi1>, vector<1x512xf32>
    %28 = arith.mulf %12, %24 : vector<1x512xf32>
    %29 = arith.mulf %28, %21 : vector<1x512xf32>
    %cst_5 = arith.constant 0.000000e+00 : f32
    %30 = vector.broadcast %cst_5 : f32 to vector<1x512xf32>
    %31 = arith.select %16, %29, %30 : vector<1x512xi1>, vector<1x512xf32>
    %32 = arith.mulf %6, %24 : vector<1x512xf32>
    %cst_6 = arith.constant 1.000000e+00 : f32
    %33 = vector.broadcast %cst_6 : f32 to vector<1x512xf32>
    %34 = arith.select %18, %32, %33 : vector<1x512xi1>, vector<1x512xf32>
    %35 = arith.mulf %9, %24 : vector<1x512xf32>
    %cst_7 = arith.constant 0.000000e+00 : f32
    %36 = vector.broadcast %cst_7 : f32 to vector<1x512xf32>
    %37 = arith.select %18, %35, %36 : vector<1x512xi1>, vector<1x512xf32>
    %38 = arith.mulf %34, %34 : vector<1x512xf32>
    %39 = arith.mulf %37, %37 : vector<1x512xf32>
    %40 = arith.subf %38, %39 : vector<1x512xf32>
    %cst_8 = arith.constant 2.000000e+00 : f32
    %41 = vector.broadcast %cst_8 : f32 to vector<1x512xf32>
    %42 = arith.mulf %41, %37 : vector<1x512xf32>
    %43 = arith.mulf %42, %34 : vector<1x512xf32>
    %44 = arith.mulf %40, %34 : vector<1x512xf32>
    %45 = arith.mulf %43, %37 : vector<1x512xf32>
    %46 = arith.subf %44, %45 : vector<1x512xf32>
    %47 = arith.mulf %43, %34 : vector<1x512xf32>
    %48 = arith.mulf %40, %37 : vector<1x512xf32>
    %49 = arith.addf %47, %48 : vector<1x512xf32>
    %50 = arith.mulf %46, %34 : vector<1x512xf32>
    %51 = arith.mulf %49, %37 : vector<1x512xf32>
    %52 = arith.subf %50, %51 : vector<1x512xf32>
    %53 = arith.mulf %49, %34 : vector<1x512xf32>
    %54 = arith.mulf %46, %37 : vector<1x512xf32>
    %55 = arith.addf %53, %54 : vector<1x512xf32>
    %56 = arith.mulf %27, %27 : vector<1x512xf32>
    %57 = arith.mulf %56, %27 : vector<1x512xf32>
    %58 = arith.mulf %57, %27 : vector<1x512xf32>
    %59 = arith.mulf %31, %31 : vector<1x512xf32>
    %60 = arith.mulf %59, %31 : vector<1x512xf32>
    %61 = arith.mulf %60, %31 : vector<1x512xf32>
    %cst_9 = arith.constant 1.000000e+00 : f32
    %62 = vector.broadcast %cst_9 : f32 to vector<1x512xf32>
    %cst_10 = arith.constant 0.000000e+00 : f32
    %63 = vector.broadcast %cst_10 : f32 to vector<1x512xf32>
    %64 = arith.subf %63, %31 : vector<1x512xf32>
    %cst_11 = arith.constant 3.000000e+00 : f32
    %65 = vector.broadcast %cst_11 : f32 to vector<1x512xf32>
    %66 = arith.mulf %65, %56 : vector<1x512xf32>
    %cst_12 = arith.constant 1.000000e+00 : f32
    %67 = vector.broadcast %cst_12 : f32 to vector<1x512xf32>
    %68 = arith.subf %66, %67 : vector<1x512xf32>
    %cst_13 = arith.constant 5.000000e-01 : f32
    %69 = vector.broadcast %cst_13 : f32 to vector<1x512xf32>
    %70 = arith.mulf %69, %68 : vector<1x512xf32>
    %cst_14 = arith.constant -3.000000e+00 : f32
    %71 = vector.broadcast %cst_14 : f32 to vector<1x512xf32>
    %72 = arith.mulf %71, %27 : vector<1x512xf32>
    %73 = arith.mulf %72, %31 : vector<1x512xf32>
    %cst_15 = arith.constant 3.000000e+00 : f32
    %74 = vector.broadcast %cst_15 : f32 to vector<1x512xf32>
    %75 = arith.mulf %74, %59 : vector<1x512xf32>
    %cst_16 = arith.constant 5.000000e+00 : f32
    %76 = vector.broadcast %cst_16 : f32 to vector<1x512xf32>
    %77 = arith.mulf %76, %57 : vector<1x512xf32>
    %cst_17 = arith.constant 3.000000e+00 : f32
    %78 = vector.broadcast %cst_17 : f32 to vector<1x512xf32>
    %79 = arith.mulf %78, %27 : vector<1x512xf32>
    %80 = arith.subf %77, %79 : vector<1x512xf32>
    %cst_18 = arith.constant 5.000000e-01 : f32
    %81 = vector.broadcast %cst_18 : f32 to vector<1x512xf32>
    %82 = arith.mulf %81, %80 : vector<1x512xf32>
    %cst_19 = arith.constant 5.000000e+00 : f32
    %83 = vector.broadcast %cst_19 : f32 to vector<1x512xf32>
    %84 = arith.mulf %83, %56 : vector<1x512xf32>
    %cst_20 = arith.constant 1.000000e+00 : f32
    %85 = vector.broadcast %cst_20 : f32 to vector<1x512xf32>
    %86 = arith.subf %84, %85 : vector<1x512xf32>
    %cst_21 = arith.constant -1.500000e+00 : f32
    %87 = vector.broadcast %cst_21 : f32 to vector<1x512xf32>
    %88 = arith.mulf %87, %86 : vector<1x512xf32>
    %89 = arith.mulf %88, %31 : vector<1x512xf32>
    %cst_22 = arith.constant 1.500000e+01 : f32
    %90 = vector.broadcast %cst_22 : f32 to vector<1x512xf32>
    %91 = arith.mulf %90, %27 : vector<1x512xf32>
    %92 = arith.mulf %91, %59 : vector<1x512xf32>
    %cst_23 = arith.constant -1.500000e+01 : f32
    %93 = vector.broadcast %cst_23 : f32 to vector<1x512xf32>
    %94 = arith.mulf %93, %60 : vector<1x512xf32>
    %cst_24 = arith.constant 3.500000e+01 : f32
    %95 = vector.broadcast %cst_24 : f32 to vector<1x512xf32>
    %96 = arith.mulf %95, %58 : vector<1x512xf32>
    %cst_25 = arith.constant 3.000000e+01 : f32
    %97 = vector.broadcast %cst_25 : f32 to vector<1x512xf32>
    %98 = arith.mulf %97, %56 : vector<1x512xf32>
    %99 = arith.subf %96, %98 : vector<1x512xf32>
    %cst_26 = arith.constant 3.000000e+00 : f32
    %100 = vector.broadcast %cst_26 : f32 to vector<1x512xf32>
    %101 = arith.addf %99, %100 : vector<1x512xf32>
    %cst_27 = arith.constant 1.250000e-01 : f32
    %102 = vector.broadcast %cst_27 : f32 to vector<1x512xf32>
    %103 = arith.mulf %102, %101 : vector<1x512xf32>
    %cst_28 = arith.constant 7.000000e+00 : f32
    %104 = vector.broadcast %cst_28 : f32 to vector<1x512xf32>
    %105 = arith.mulf %104, %57 : vector<1x512xf32>
    %cst_29 = arith.constant 3.000000e+00 : f32
    %106 = vector.broadcast %cst_29 : f32 to vector<1x512xf32>
    %107 = arith.mulf %106, %27 : vector<1x512xf32>
    %108 = arith.subf %105, %107 : vector<1x512xf32>
    %cst_30 = arith.constant -2.500000e+00 : f32
    %109 = vector.broadcast %cst_30 : f32 to vector<1x512xf32>
    %110 = arith.mulf %109, %108 : vector<1x512xf32>
    %111 = arith.mulf %110, %31 : vector<1x512xf32>
    %cst_31 = arith.constant 7.000000e+00 : f32
    %112 = vector.broadcast %cst_31 : f32 to vector<1x512xf32>
    %113 = arith.mulf %112, %56 : vector<1x512xf32>
    %cst_32 = arith.constant 1.000000e+00 : f32
    %114 = vector.broadcast %cst_32 : f32 to vector<1x512xf32>
    %115 = arith.subf %113, %114 : vector<1x512xf32>
    %cst_33 = arith.constant 7.500000e+00 : f32
    %116 = vector.broadcast %cst_33 : f32 to vector<1x512xf32>
    %117 = arith.mulf %116, %115 : vector<1x512xf32>
    %118 = arith.mulf %117, %59 : vector<1x512xf32>
    %cst_34 = arith.constant -1.050000e+02 : f32
    %119 = vector.broadcast %cst_34 : f32 to vector<1x512xf32>
    %120 = arith.mulf %119, %27 : vector<1x512xf32>
    %121 = arith.mulf %120, %60 : vector<1x512xf32>
    %cst_35 = arith.constant 1.050000e+02 : f32
    %122 = vector.broadcast %cst_35 : f32 to vector<1x512xf32>
    %123 = arith.mulf %122, %61 : vector<1x512xf32>
    %cst_36 = arith.constant 0.282094806 : f32
    %124 = vector.broadcast %cst_36 : f32 to vector<1x512xf32>
    %125 = arith.mulf %124, %62 : vector<1x512xf32>
    %cst_37 = arith.constant 0.488602519 : f32
    %126 = vector.broadcast %cst_37 : f32 to vector<1x512xf32>
    %127 = arith.mulf %126, %37 : vector<1x512xf32>
    %128 = arith.mulf %127, %64 : vector<1x512xf32>
    %cst_38 = arith.constant 0.488602519 : f32
    %129 = vector.broadcast %cst_38 : f32 to vector<1x512xf32>
    %130 = arith.mulf %129, %27 : vector<1x512xf32>
    %cst_39 = arith.constant 0.488602519 : f32
    %131 = vector.broadcast %cst_39 : f32 to vector<1x512xf32>
    %132 = arith.mulf %131, %34 : vector<1x512xf32>
    %133 = arith.mulf %132, %64 : vector<1x512xf32>
    %cst_40 = arith.constant 0.1820914 : f32
    %134 = vector.broadcast %cst_40 : f32 to vector<1x512xf32>
    %135 = arith.mulf %134, %43 : vector<1x512xf32>
    %136 = arith.mulf %135, %75 : vector<1x512xf32>
    %cst_41 = arith.constant 0.3641828 : f32
    %137 = vector.broadcast %cst_41 : f32 to vector<1x512xf32>
    %138 = arith.mulf %137, %37 : vector<1x512xf32>
    %139 = arith.mulf %138, %73 : vector<1x512xf32>
    %cst_42 = arith.constant 0.63078314 : f32
    %140 = vector.broadcast %cst_42 : f32 to vector<1x512xf32>
    %141 = arith.mulf %140, %70 : vector<1x512xf32>
    %cst_43 = arith.constant 0.3641828 : f32
    %142 = vector.broadcast %cst_43 : f32 to vector<1x512xf32>
    %143 = arith.mulf %142, %34 : vector<1x512xf32>
    %144 = arith.mulf %143, %73 : vector<1x512xf32>
    %cst_44 = arith.constant 0.1820914 : f32
    %145 = vector.broadcast %cst_44 : f32 to vector<1x512xf32>
    %146 = arith.mulf %145, %40 : vector<1x512xf32>
    %147 = arith.mulf %146, %75 : vector<1x512xf32>
    %cst_45 = arith.constant 0.0393362381 : f32
    %148 = vector.broadcast %cst_45 : f32 to vector<1x512xf32>
    %149 = arith.mulf %148, %49 : vector<1x512xf32>
    %150 = arith.mulf %149, %94 : vector<1x512xf32>
    %cst_46 = arith.constant 0.0963537171 : f32
    %151 = vector.broadcast %cst_46 : f32 to vector<1x512xf32>
    %152 = arith.mulf %151, %43 : vector<1x512xf32>
    %153 = arith.mulf %152, %92 : vector<1x512xf32>
    %cst_47 = arith.constant 0.304697186 : f32
    %154 = vector.broadcast %cst_47 : f32 to vector<1x512xf32>
    %155 = arith.mulf %154, %37 : vector<1x512xf32>
    %156 = arith.mulf %155, %89 : vector<1x512xf32>
    %cst_48 = arith.constant 0.746352672 : f32
    %157 = vector.broadcast %cst_48 : f32 to vector<1x512xf32>
    %158 = arith.mulf %157, %82 : vector<1x512xf32>
    %cst_49 = arith.constant 0.304697186 : f32
    %159 = vector.broadcast %cst_49 : f32 to vector<1x512xf32>
    %160 = arith.mulf %159, %34 : vector<1x512xf32>
    %161 = arith.mulf %160, %89 : vector<1x512xf32>
    %cst_50 = arith.constant 0.0963537171 : f32
    %162 = vector.broadcast %cst_50 : f32 to vector<1x512xf32>
    %163 = arith.mulf %162, %40 : vector<1x512xf32>
    %164 = arith.mulf %163, %92 : vector<1x512xf32>
    %cst_51 = arith.constant 0.0393362381 : f32
    %165 = vector.broadcast %cst_51 : f32 to vector<1x512xf32>
    %166 = arith.mulf %165, %46 : vector<1x512xf32>
    %167 = arith.mulf %166, %94 : vector<1x512xf32>
    %cst_52 = arith.constant 5.960340e-03 : f32
    %168 = vector.broadcast %cst_52 : f32 to vector<1x512xf32>
    %169 = arith.mulf %168, %55 : vector<1x512xf32>
    %170 = arith.mulf %169, %123 : vector<1x512xf32>
    %cst_53 = arith.constant 0.0168583877 : f32
    %171 = vector.broadcast %cst_53 : f32 to vector<1x512xf32>
    %172 = arith.mulf %171, %49 : vector<1x512xf32>
    %173 = arith.mulf %172, %121 : vector<1x512xf32>
    %cst_54 = arith.constant 0.063078314 : f32
    %174 = vector.broadcast %cst_54 : f32 to vector<1x512xf32>
    %175 = arith.mulf %174, %43 : vector<1x512xf32>
    %176 = arith.mulf %175, %118 : vector<1x512xf32>
    %cst_55 = arith.constant 0.267618626 : f32
    %177 = vector.broadcast %cst_55 : f32 to vector<1x512xf32>
    %178 = arith.mulf %177, %37 : vector<1x512xf32>
    %179 = arith.mulf %178, %111 : vector<1x512xf32>
    %cst_56 = arith.constant 0.846284389 : f32
    %180 = vector.broadcast %cst_56 : f32 to vector<1x512xf32>
    %181 = arith.mulf %180, %103 : vector<1x512xf32>
    %cst_57 = arith.constant 0.267618626 : f32
    %182 = vector.broadcast %cst_57 : f32 to vector<1x512xf32>
    %183 = arith.mulf %182, %34 : vector<1x512xf32>
    %184 = arith.mulf %183, %111 : vector<1x512xf32>
    %cst_58 = arith.constant 0.063078314 : f32
    %185 = vector.broadcast %cst_58 : f32 to vector<1x512xf32>
    %186 = arith.mulf %185, %40 : vector<1x512xf32>
    %187 = arith.mulf %186, %118 : vector<1x512xf32>
    %cst_59 = arith.constant 0.0168583877 : f32
    %188 = vector.broadcast %cst_59 : f32 to vector<1x512xf32>
    %189 = arith.mulf %188, %46 : vector<1x512xf32>
    %190 = arith.mulf %189, %121 : vector<1x512xf32>
    %cst_60 = arith.constant 5.960340e-03 : f32
    %191 = vector.broadcast %cst_60 : f32 to vector<1x512xf32>
    %192 = arith.mulf %191, %52 : vector<1x512xf32>
    %193 = arith.mulf %192, %123 : vector<1x512xf32>
    %c0_61 = arith.constant 0 : index
    %c0_62 = arith.constant 0 : index
    %194 = vector.load %arg2[%c0_61, %c0_62] : memref<25x512xf32, #tpu.memory_space<vmem>>, vector<1x512xf32>
    tpu.vector_store %arg2[%c0_61, %c0_62], %125 {strides = array<i32>} : memref<25x512xf32, #tpu.memory_space<vmem>>, vector<1x512xf32>,
    %c1 = arith.constant 1 : index
    %c0_63 = arith.constant 0 : index
    %195 = vector.load %arg2[%c1, %c0_63] : memref<25x512xf32, #tpu.memory_space<vmem>>, vector<1x512xf32>
    tpu.vector_store %arg2[%c1, %c0_63], %128 {strides = array<i32>} : memref<25x512xf32, #tpu.memory_space<vmem>>, vector<1x512xf32>,
    %c2 = arith.constant 2 : index
    %c0_64 = arith.constant 0 : index
    %196 = vector.load %arg2[%c2, %c0_64] : memref<25x512xf32, #tpu.memory_space<vmem>>, vector<1x512xf32>
    tpu.vector_store %arg2[%c2, %c0_64], %130 {strides = array<i32>} : memref<25x512xf32, #tpu.memory_space<vmem>>, vector<1x512xf32>,
    %c3 = arith.constant 3 : index
    %c0_65 = arith.constant 0 : index
    %197 = vector.load %arg2[%c3, %c0_65] : memref<25x512xf32, #tpu.memory_space<vmem>>, vector<1x512xf32>
    tpu.vector_store %arg2[%c3, %c0_65], %133 {strides = array<i32>} : memref<25x512xf32, #tpu.memory_space<vmem>>, vector<1x512xf32>,
    %c4 = arith.constant 4 : index
    %c0_66 = arith.constant 0 : index
    %198 = vector.load %arg2[%c4, %c0_66] : memref<25x512xf32, #tpu.memory_space<vmem>>, vector<1x512xf32>
    tpu.vector_store %arg2[%c4, %c0_66], %136 {strides = array<i32>} : memref<25x512xf32, #tpu.memory_space<vmem>>, vector<1x512xf32>,
    %c5 = arith.constant 5 : index
    %c0_67 = arith.constant 0 : index
    %199 = vector.load %arg2[%c5, %c0_67] : memref<25x512xf32, #tpu.memory_space<vmem>>, vector<1x512xf32>
    tpu.vector_store %arg2[%c5, %c0_67], %139 {strides = array<i32>} : memref<25x512xf32, #tpu.memory_space<vmem>>, vector<1x512xf32>,
    %c6 = arith.constant 6 : index
    %c0_68 = arith.constant 0 : index
    %200 = vector.load %arg2[%c6, %c0_68] : memref<25x512xf32, #tpu.memory_space<vmem>>, vector<1x512xf32>
    tpu.vector_store %arg2[%c6, %c0_68], %141 {strides = array<i32>} : memref<25x512xf32, #tpu.memory_space<vmem>>, vector<1x512xf32>,
    %c7 = arith.constant 7 : index
    %c0_69 = arith.constant 0 : index
    %201 = vector.load %arg2[%c7, %c0_69] : memref<25x512xf32, #tpu.memory_space<vmem>>, vector<1x512xf32>
    tpu.vector_store %arg2[%c7, %c0_69], %144 {strides = array<i32>} : memref<25x512xf32, #tpu.memory_space<vmem>>, vector<1x512xf32>,
    %c8 = arith.constant 8 : index
    %c0_70 = arith.constant 0 : index
    %202 = vector.load %arg2[%c8, %c0_70] : memref<25x512xf32, #tpu.memory_space<vmem>>, vector<1x512xf32>
    tpu.vector_store %arg2[%c8, %c0_70], %147 {strides = array<i32>} : memref<25x512xf32, #tpu.memory_space<vmem>>, vector<1x512xf32>,
    %c9 = arith.constant 9 : index
    %c0_71 = arith.constant 0 : index
    %203 = vector.load %arg2[%c9, %c0_71] : memref<25x512xf32, #tpu.memory_space<vmem>>, vector<1x512xf32>
    tpu.vector_store %arg2[%c9, %c0_71], %150 {strides = array<i32>} : memref<25x512xf32, #tpu.memory_space<vmem>>, vector<1x512xf32>,
    %c10 = arith.constant 10 : index
    %c0_72 = arith.constant 0 : index
    %204 = vector.load %arg2[%c10, %c0_72] : memref<25x512xf32, #tpu.memory_space<vmem>>, vector<1x512xf32>
    tpu.vector_store %arg2[%c10, %c0_72], %153 {strides = array<i32>} : memref<25x512xf32, #tpu.memory_space<vmem>>, vector<1x512xf32>,
    %c11 = arith.constant 11 : index
    %c0_73 = arith.constant 0 : index
    %205 = vector.load %arg2[%c11, %c0_73] : memref<25x512xf32, #tpu.memory_space<vmem>>, vector<1x512xf32>
    tpu.vector_store %arg2[%c11, %c0_73], %156 {strides = array<i32>} : memref<25x512xf32, #tpu.memory_space<vmem>>, vector<1x512xf32>,
    %c12 = arith.constant 12 : index
    %c0_74 = arith.constant 0 : index
    %206 = vector.load %arg2[%c12, %c0_74] : memref<25x512xf32, #tpu.memory_space<vmem>>, vector<1x512xf32>
    tpu.vector_store %arg2[%c12, %c0_74], %158 {strides = array<i32>} : memref<25x512xf32, #tpu.memory_space<vmem>>, vector<1x512xf32>,
    %c13 = arith.constant 13 : index
    %c0_75 = arith.constant 0 : index
    %207 = vector.load %arg2[%c13, %c0_75] : memref<25x512xf32, #tpu.memory_space<vmem>>, vector<1x512xf32>
    tpu.vector_store %arg2[%c13, %c0_75], %161 {strides = array<i32>} : memref<25x512xf32, #tpu.memory_space<vmem>>, vector<1x512xf32>,
    %c14 = arith.constant 14 : index
    %c0_76 = arith.constant 0 : index
    %208 = vector.load %arg2[%c14, %c0_76] : memref<25x512xf32, #tpu.memory_space<vmem>>, vector<1x512xf32>
    tpu.vector_store %arg2[%c14, %c0_76], %164 {strides = array<i32>} : memref<25x512xf32, #tpu.memory_space<vmem>>, vector<1x512xf32>,
    %c15 = arith.constant 15 : index
    %c0_77 = arith.constant 0 : index
    %209 = vector.load %arg2[%c15, %c0_77] : memref<25x512xf32, #tpu.memory_space<vmem>>, vector<1x512xf32>
    tpu.vector_store %arg2[%c15, %c0_77], %167 {strides = array<i32>} : memref<25x512xf32, #tpu.memory_space<vmem>>, vector<1x512xf32>,
    %c16 = arith.constant 16 : index
    %c0_78 = arith.constant 0 : index
    %210 = vector.load %arg2[%c16, %c0_78] : memref<25x512xf32, #tpu.memory_space<vmem>>, vector<1x512xf32>
    tpu.vector_store %arg2[%c16, %c0_78], %170 {strides = array<i32>} : memref<25x512xf32, #tpu.memory_space<vmem>>, vector<1x512xf32>,
    %c17 = arith.constant 17 : index
    %c0_79 = arith.constant 0 : index
    %211 = vector.load %arg2[%c17, %c0_79] : memref<25x512xf32, #tpu.memory_space<vmem>>, vector<1x512xf32>
    tpu.vector_store %arg2[%c17, %c0_79], %173 {strides = array<i32>} : memref<25x512xf32, #tpu.memory_space<vmem>>, vector<1x512xf32>,
    %c18 = arith.constant 18 : index
    %c0_80 = arith.constant 0 : index
    %212 = vector.load %arg2[%c18, %c0_80] : memref<25x512xf32, #tpu.memory_space<vmem>>, vector<1x512xf32>
    tpu.vector_store %arg2[%c18, %c0_80], %176 {strides = array<i32>} : memref<25x512xf32, #tpu.memory_space<vmem>>, vector<1x512xf32>,
    %c19 = arith.constant 19 : index
    %c0_81 = arith.constant 0 : index
    %213 = vector.load %arg2[%c19, %c0_81] : memref<25x512xf32, #tpu.memory_space<vmem>>, vector<1x512xf32>
    tpu.vector_store %arg2[%c19, %c0_81], %179 {strides = array<i32>} : memref<25x512xf32, #tpu.memory_space<vmem>>, vector<1x512xf32>,
    %c20 = arith.constant 20 : index
    %c0_82 = arith.constant 0 : index
    %214 = vector.load %arg2[%c20, %c0_82] : memref<25x512xf32, #tpu.memory_space<vmem>>, vector<1x512xf32>
    tpu.vector_store %arg2[%c20, %c0_82], %181 {strides = array<i32>} : memref<25x512xf32, #tpu.memory_space<vmem>>, vector<1x512xf32>,
    %c21 = arith.constant 21 : index
    %c0_83 = arith.constant 0 : index
    %215 = vector.load %arg2[%c21, %c0_83] : memref<25x512xf32, #tpu.memory_space<vmem>>, vector<1x512xf32>
    tpu.vector_store %arg2[%c21, %c0_83], %184 {strides = array<i32>} : memref<25x512xf32, #tpu.memory_space<vmem>>, vector<1x512xf32>,
    %c22 = arith.constant 22 : index
    %c0_84 = arith.constant 0 : index
    %216 = vector.load %arg2[%c22, %c0_84] : memref<25x512xf32, #tpu.memory_space<vmem>>, vector<1x512xf32>
    tpu.vector_store %arg2[%c22, %c0_84], %187 {strides = array<i32>} : memref<25x512xf32, #tpu.memory_space<vmem>>, vector<1x512xf32>,
    %c23 = arith.constant 23 : index
    %c0_85 = arith.constant 0 : index
    %217 = vector.load %arg2[%c23, %c0_85] : memref<25x512xf32, #tpu.memory_space<vmem>>, vector<1x512xf32>
    tpu.vector_store %arg2[%c23, %c0_85], %190 {strides = array<i32>} : memref<25x512xf32, #tpu.memory_space<vmem>>, vector<1x512xf32>,
    %c24 = arith.constant 24 : index
    %c0_86 = arith.constant 0 : index
    %218 = vector.load %arg2[%c24, %c0_86] : memref<25x512xf32, #tpu.memory_space<vmem>>, vector<1x512xf32>
    tpu.vector_store %arg2[%c24, %c0_86], %193 {strides = array<i32>} : memref<25x512xf32, #tpu.memory_space<vmem>>, vector<1x512xf32>,
    return
  }
  func.func @transform_0(%arg0: i32) -> (i32, i32) {
    %c0_i32 = arith.constant 0 : i32
    %c0_i32_0 = arith.constant 0 : i32
    return %c0_i32, %arg0 : i32, i32
  }
  func.func @transform_1(%arg0: i32) -> (i32, i32) {
    %c0_i32 = arith.constant 0 : i32
    %c0_i32_0 = arith.constant 0 : i32
    return %c0_i32, %arg0 : i32, i32
  }
}

</mosaic_0001>

<llo_original>
// kernel: tpu_custom_call.1
$region0: #{tpu_custom_call.1}
  #allocation0 [shape = 'u32[]', space=smem, size = 0x4, offset = 0x4, fixed_abs, tag = 'smem constant byte address 0x4 - core index']
  #allocation1 [shape = 'u32[144,128]{1,0:T(1,128)}', space=vmem, size = 0x12000, scoped, tag = 'internal scratch']
  %s0 = inlined_call_operand.hbm [shape: f32[6,512], index: 0, kind: input, shape index: {}]
  %s1 = inlined_call_operand.hbm [shape: f32[25,512], index: 1, kind: output, shape index: {}]
  %s2 = sld [smem:[#allocation0]]
  $region18: #{tpu_custom_call.1} parent=0
    _
  %s4 = ssub.s32 1, %s2
  %s5 = scalar_select 0, %s4, %s2
  $region1: #{tpu_custom_call.1} parent=0
    #allocation2 [shape = 'u8[16384]{0}', space=vmem, size = 0x4000, scoped, tag = 'input window, operand 0, single buffered']
    #allocation3 [shape = 's32[1]{0}', space=sflag, size = 0x4, scoped, tag = 'scoped memory for tpu_custom_call.1']
    #allocation4 [shape = 's32[1]{0}', space=sflag, size = 0x4, scoped, tag = 'scoped memory for tpu_custom_call.1']
    #allocation5 [shape = 'u8[65536]{0}', space=vmem, size = 0x10000, scoped, tag = 'output window, operand 0, single buffered']
    %6 = vsyncpa [#allocation3], 0
    %7 = vsyncpa [#allocation4], 0
    // Predicated region
    $region2: #{tpu_custom_call.1} parent=1 // pred_check
      _
    $region3: #{tpu_custom_call.1} parent=1 // pred_check_branch
      %9 = sbr.rel (0) target = $region5
    $region4: #{tpu_custom_call.1} parent=1 // pred_region
      %s11 = ssub.s32 512, 512
      %12 = vsyncadd [#allocation3], %s11
      %s14 = sshll.u32 [#allocation2], 4
      %s15 = int_to_ptr.vmem [resolvable:$true] %s14
      %17 = dma.hbm_to_vmem [thread:$0]  %s0, 512, %s15, [#allocation3]
    $region5: #{tpu_custom_call.1} parent=1 // pred_fallthru
      _
    // Predicated region
    $region6: #{tpu_custom_call.1} parent=1 // pred_check
      _
    $region7: #{tpu_custom_call.1} parent=1 // pred_check_branch
      %19 = sbr.rel (0) target = $region9
    $region8: #{tpu_custom_call.1} parent=1 // pred_region
      %20 = dma.done [#allocation3], 512
    $region9: #{tpu_custom_call.1} parent=1 // pred_fallthru
      _
    %v21 = vld [vmem:[#allocation2] sm:$0x3f]
    %v22 = vld [vmem:[#allocation2 + $0x8] sm:$0x3f]
    %v23 = vld [vmem:[#allocation2 + $0x10] sm:$0x3f]
    %v24 = vld [vmem:[#allocation2 + $0x18] sm:$0x3f]
    %v29 = vrot.slane %v21, 3
    %v30 = vrot.slane %v22, 3
    %v31 = vrot.slane %v23, 3
    %v32 = vrot.slane %v24, 3
    %v37 = vsub.f32 %v21, %v29
    %v38 = vsub.f32 %v22, %v30
    %v39 = vsub.f32 %v23, %v31
    %v40 = vsub.f32 %v24, %v32
    %v41 = vmul.f32 %v37, %v37
    %v42 = vmul.f32 %v38, %v38
    %v43 = vmul.f32 %v39, %v39
    %v44 = vmul.f32 %v40, %v40
    %v49 = vrot.slane %v41, 1
    %v50 = vrot.slane %v42, 1
    %v51 = vrot.slane %v43, 1
    %v52 = vrot.slane %v44, 1
    %v57 = vadd.f32 %v41, %v49
    %v58 = vadd.f32 %v42, %v50
    %v59 = vadd.f32 %v43, %v51
    %v60 = vadd.f32 %v44, %v52
    %v61 = vrot.slane %v41, 7
    %v62 = vrot.slane %v42, 7
    %v63 = vrot.slane %v43, 7
    %v64 = vrot.slane %v44, 7
    %v69 = vadd.f32 %v57, %v61
    %v70 = vadd.f32 %v58, %v62
    %v71 = vadd.f32 %v59, %v63
    %v72 = vadd.f32 %v60, %v64
    %vm73 = vcmp.gt.f32.partialorder %v69, 0.0
    %vm74 = vcmp.gt.f32.partialorder %v70, 0.0
    %vm75 = vcmp.gt.f32.partialorder %v71, 0.0
    %vm76 = vcmp.gt.f32.partialorder %v72, 0.0
    %vm77 = vcmp.gt.f32.partialorder %v57, 0.0
    %vm78 = vcmp.gt.f32.partialorder %v58, 0.0
    %vm79 = vcmp.gt.f32.partialorder %v59, 0.0
    %vm80 = vcmp.gt.f32.partialorder %v60, 0.0
    %v81 = vsel %vm73, %v69, 1.0
    %v82 = vsel %vm74, %v70, 1.0
    %v83 = vsel %vm75, %v71, 1.0
    %v84 = vsel %vm76, %v72, 1.0
    %v85 = vrsqrt.pop %v81
    %v86 = vrsqrt.pop %v82
    %v87 = vrsqrt.pop %v83
    %v88 = vrsqrt.pop %v84
    %v89 = vsel %vm77, %v57, 1.0
    %v90 = vsel %vm78, %v58, 1.0
    %v91 = vsel %vm79, %v59, 1.0
    %v92 = vsel %vm80, %v60, 1.0
    %v93 = vrsqrt.pop %v89
    %v94 = vrsqrt.pop %v90
    %v95 = vrsqrt.pop %v91
    %v96 = vrsqrt.pop %v92
    %v101 = vrot.slane %v85, 1
    %v102 = vrot.slane %v86, 1
    %v103 = vrot.slane %v87, 1
    %v104 = vrot.slane %v88, 1
    %v109 = vmul.f32 %v37, %v101
    %v110 = vmul.f32 %v38, %v102
    %v111 = vmul.f32 %v39, %v103
    %v112 = vmul.f32 %v40, %v104
    %v117 = vrot.slane %v109, 7
    %v118 = vrot.slane %v110, 7
    %v119 = vrot.slane %v111, 7
    %v120 = vrot.slane %v112, 7
    %v125 = vsel %vm73, %v117, 1.0
    %v126 = vsel %vm74, %v118, 1.0
    %v127 = vsel %vm75, %v119, 1.0
    %v128 = vsel %vm76, %v120, 1.0
    %v129 = vmul.f32 %v57, %v93
    %v130 = vmul.f32 %v58, %v94
    %v131 = vmul.f32 %v59, %v95
    %v132 = vmul.f32 %v60, %v96
    %v133 = vmul.f32 %v129, %v85
    %v134 = vmul.f32 %v130, %v86
    %v135 = vmul.f32 %v131, %v87
    %v136 = vmul.f32 %v132, %v88
    %v137 = vsel %vm73, %v133, 0.0
    %v138 = vsel %vm74, %v134, 0.0
    %v139 = vsel %vm75, %v135, 0.0
    %v140 = vsel %vm76, %v136, 0.0
    %v141 = vmul.f32 %v37, %v93
    %v142 = vmul.f32 %v38, %v94
    %v143 = vmul.f32 %v39, %v95
    %v144 = vmul.f32 %v40, %v96
    %v145 = vsel %vm77, %v141, 1.0
    %v146 = vsel %vm78, %v142, 1.0
    %v147 = vsel %vm79, %v143, 1.0
    %v148 = vsel %vm80, %v144, 1.0
    %v153 = vrot.slane %v93, 7
    %v154 = vrot.slane %v94, 7
    %v155 = vrot.slane %v95, 7
    %v156 = vrot.slane %v96, 7
    %v161 = vmul.f32 %v37, %v153
    %v162 = vmul.f32 %v38, %v154
    %v163 = vmul.f32 %v39, %v155
    %v164 = vmul.f32 %v40, %v156
    %v169 = vrot.slane %v161, 1
    %v170 = vrot.slane %v162, 1
    %v171 = vrot.slane %v163, 1
    %v172 = vrot.slane %v164, 1
    %v177 = vsel %vm77, %v169, 0.0
    %v178 = vsel %vm78, %v170, 0.0
    %v179 = vsel %vm79, %v171, 0.0
    %v180 = vsel %vm80, %v172, 0.0
    %v181 = vmul.f32 %v145, %v145
    %v182 = vmul.f32 %v146, %v146
    %v183 = vmul.f32 %v147, %v147
    %v184 = vmul.f32 %v148, %v148
    %v185 = vmul.f32 %v177, %v177
    %v186 = vmul.f32 %v178, %v178
    %v187 = vmul.f32 %v179, %v179
    %v188 = vmul.f32 %v180, %v180
    %v189 = vsub.f32 %v181, %v185
    %v190 = vsub.f32 %v182, %v186
    %v191 = vsub.f32 %v183, %v187
    %v192 = vsub.f32 %v184, %v188
    %v193 = vmul.f32 %v177, 2.0
    %v194 = vmul.f32 %v178, 2.0
    %v195 = vmul.f32 %v179, 2.0
    %v196 = vmul.f32 %v180, 2.0
    %v197 = vmul.f32 %v193, %v145
    %v198 = vmul.f32 %v194, %v146
    %v199 = vmul.f32 %v195, %v147
    %v200 = vmul.f32 %v196, %v148
    %v201 = vmul.f32 %v189, %v145
    %v202 = vmul.f32 %v190, %v146
    %v203 = vmul.f32 %v191, %v147
    %v204 = vmul.f32 %v192, %v148
    %v205 = vmul.f32 %v197, %v177
    %v206 = vmul.f32 %v198, %v178
    %v207 = vmul.f32 %v199, %v179
    %v208 = vmul.f32 %v200, %v180
    %v209 = vsub.f32 %v201, %v205
    %v210 = vsub.f32 %v202, %v206
    %v211 = vsub.f32 %v203, %v207
    %v212 = vsub.f32 %v204, %v208
    %v213 = vmul.f32 %v197, %v145
    %v214 = vmul.f32 %v198, %v146
    %v215 = vmul.f32 %v199, %v147
    %v216 = vmul.f32 %v200, %v148
    %v217 = vmul.f32 %v189, %v177
    %v218 = vmul.f32 %v190, %v178
    %v219 = vmul.f32 %v191, %v179
    %v220 = vmul.f32 %v192, %v180
    %v221 = vadd.f32 %v213, %v217
    %v222 = vadd.f32 %v214, %v218
    %v223 = vadd.f32 %v215, %v219
    %v224 = vadd.f32 %v216, %v220
    %v225 = vmul.f32 %v209, %v145
    %v226 = vmul.f32 %v210, %v146
    %v227 = vmul.f32 %v211, %v147
    %v228 = vmul.f32 %v212, %v148
    %v229 = vmul.f32 %v221, %v177
    %v230 = vmul.f32 %v222, %v178
    %v231 = vmul.f32 %v223, %v179
    %v232 = vmul.f32 %v224, %v180
    %v233 = vsub.f32 %v225, %v229
    %v234 = vsub.f32 %v226, %v230
    %v235 = vsub.f32 %v227, %v231
    %v236 = vsub.f32 %v228, %v232
    %v237 = vmul.f32 %v221, %v145
    %v238 = vmul.f32 %v222, %v146
    %v239 = vmul.f32 %v223, %v147
    %v240 = vmul.f32 %v224, %v148
    %v241 = vmul.f32 %v209, %v177
    %v242 = vmul.f32 %v210, %v178
    %v243 = vmul.f32 %v211, %v179
    %v244 = vmul.f32 %v212, %v180
    %v245 = vadd.f32 %v237, %v241
    %v246 = vadd.f32 %v238, %v242
    %v247 = vadd.f32 %v239, %v243
    %v248 = vadd.f32 %v240, %v244
    %v249 = vmul.f32 %v125, %v125
    %v250 = vmul.f32 %v126, %v126
    %v251 = vmul.f32 %v127, %v127
    %v252 = vmul.f32 %v128, %v128
    %v253 = vmul.f32 %v249, %v125
    %v254 = vmul.f32 %v250, %v126
    %v255 = vmul.f32 %v251, %v127
    %v256 = vmul.f32 %v252, %v128
    %v257 = vmul.f32 %v253, %v125
    %v258 = vmul.f32 %v254, %v126
    %v259 = vmul.f32 %v255, %v127
    %v260 = vmul.f32 %v256, %v128
    %v261 = vmul.f32 %v137, %v137
    %v262 = vmul.f32 %v138, %v138
    %v263 = vmul.f32 %v139, %v139
    %v264 = vmul.f32 %v140, %v140
    %v265 = vmul.f32 %v261, %v137
    %v266 = vmul.f32 %v262, %v138
    %v267 = vmul.f32 %v263, %v139
    %v268 = vmul.f32 %v264, %v140
    %v269 = vmul.f32 %v265, %v137
    %v270 = vmul.f32 %v266, %v138
    %v271 = vmul.f32 %v267, %v139
    %v272 = vmul.f32 %v268, %v140
    %v273 = vsub.f32 0.0, %v137
    %v274 = vsub.f32 0.0, %v138
    %v275 = vsub.f32 0.0, %v139
    %v276 = vsub.f32 0.0, %v140
    %v277 = vmul.f32 %v249, 3.0
    %v278 = vmul.f32 %v250, 3.0
    %v279 = vmul.f32 %v251, 3.0
    %v280 = vmul.f32 %v252, 3.0
    %v281 = vsub.f32 %v277, 1.0
    %v282 = vsub.f32 %v278, 1.0
    %v283 = vsub.f32 %v279, 1.0
    %v284 = vsub.f32 %v280, 1.0
    %v285 = vmul.f32 %v281, 0.5
    %v286 = vmul.f32 %v282, 0.5
    %v287 = vmul.f32 %v283, 0.5
    %v288 = vmul.f32 %v284, 0.5
    %v289 = vmul.f32 %v125, -3.0
    %v290 = vmul.f32 %v126, -3.0
    %v291 = vmul.f32 %v127, -3.0
    %v292 = vmul.f32 %v128, -3.0
    %v293 = vmul.f32 %v289, %v137
    %v294 = vmul.f32 %v290, %v138
    %v295 = vmul.f32 %v291, %v139
    %v296 = vmul.f32 %v292, %v140
    %v297 = vmul.f32 %v261, 3.0
    %v298 = vmul.f32 %v262, 3.0
    %v299 = vmul.f32 %v263, 3.0
    %v300 = vmul.f32 %v264, 3.0
    %v301 = vmul.f32 %v253, 5.0
    %v302 = vmul.f32 %v254, 5.0
    %v303 = vmul.f32 %v255, 5.0
    %v304 = vmul.f32 %v256, 5.0
    %v305 = vmul.f32 %v125, 3.0
    %v306 = vmul.f32 %v126, 3.0
    %v307 = vmul.f32 %v127, 3.0
    %v308 = vmul.f32 %v128, 3.0
    %v309 = vsub.f32 %v301, %v305
    %v310 = vsub.f32 %v302, %v306
    %v311 = vsub.f32 %v303, %v307
    %v312 = vsub.f32 %v304, %v308
    %v313 = vmul.f32 %v309, 0.5
    %v314 = vmul.f32 %v310, 0.5
    %v315 = vmul.f32 %v311, 0.5
    %v316 = vmul.f32 %v312, 0.5
    %v317 = vmul.f32 %v249, 5.0
    %v318 = vmul.f32 %v250, 5.0
    %v319 = vmul.f32 %v251, 5.0
    %v320 = vmul.f32 %v252, 5.0
    %v321 = vsub.f32 %v317, 1.0
    %v322 = vsub.f32 %v318, 1.0
    %v323 = vsub.f32 %v319, 1.0
    %v324 = vsub.f32 %v320, 1.0
    %v325 = vmul.f32 %v321, -1.5
    %v326 = vmul.f32 %v322, -1.5
    %v327 = vmul.f32 %v323, -1.5
    %v328 = vmul.f32 %v324, -1.5
    %v329 = vmul.f32 %v325, %v137
    %v330 = vmul.f32 %v326, %v138
    %v331 = vmul.f32 %v327, %v139
    %v332 = vmul.f32 %v328, %v140
    %v333 = vmul.f32 %v125, 15.0
    %v334 = vmul.f32 %v126, 15.0
    %v335 = vmul.f32 %v127, 15.0
    %v336 = vmul.f32 %v128, 15.0
    %v337 = vmul.f32 %v333, %v261
    %v338 = vmul.f32 %v334, %v262
    %v339 = vmul.f32 %v335, %v263
    %v340 = vmul.f32 %v336, %v264
    %v341 = vmul.f32 %v265, -15.0
    %v342 = vmul.f32 %v266, -15.0
    %v343 = vmul.f32 %v267, -15.0
    %v344 = vmul.f32 %v268, -15.0
    %v345 = vmul.f32 %v257, 35.0
    %v346 = vmul.f32 %v258, 35.0
    %v347 = vmul.f32 %v259, 35.0
    %v348 = vmul.f32 %v260, 35.0
    %v349 = vmul.f32 %v249, 30.0
    %v350 = vmul.f32 %v250, 30.0
    %v351 = vmul.f32 %v251, 30.0
    %v352 = vmul.f32 %v252, 30.0
    %v353 = vsub.f32 %v345, %v349
    %v354 = vsub.f32 %v346, %v350
    %v355 = vsub.f32 %v347, %v351
    %v356 = vsub.f32 %v348, %v352
    %v357 = vadd.f32 %v353, 3.0
    %v358 = vadd.f32 %v354, 3.0
    %v359 = vadd.f32 %v355, 3.0
    %v360 = vadd.f32 %v356, 3.0
    %v361 = vmul.f32 %v357, 0.125
    %v362 = vmul.f32 %v358, 0.125
    %v363 = vmul.f32 %v359, 0.125
    %v364 = vmul.f32 %v360, 0.125
    %v365 = vmul.f32 %v253, 7.0
    %v366 = vmul.f32 %v254, 7.0
    %v367 = vmul.f32 %v255, 7.0
    %v368 = vmul.f32 %v256, 7.0
    %v369 = vsub.f32 %v365, %v305
    %v370 = vsub.f32 %v366, %v306
    %v371 = vsub.f32 %v367, %v307
    %v372 = vsub.f32 %v368, %v308
    %v373 = vmul.f32 %v369, -2.5
    %v374 = vmul.f32 %v370, -2.5
    %v375 = vmul.f32 %v371, -2.5
    %v376 = vmul.f32 %v372, -2.5
    %v377 = vmul.f32 %v373, %v137
    %v378 = vmul.f32 %v374, %v138
    %v379 = vmul.f32 %v375, %v139
    %v380 = vmul.f32 %v376, %v140
    %v381 = vmul.f32 %v249, 7.0
    %v382 = vmul.f32 %v250, 7.0
    %v383 = vmul.f32 %v251, 7.0
    %v384 = vmul.f32 %v252, 7.0
    %v385 = vsub.f32 %v381, 1.0
    %v386 = vsub.f32 %v382, 1.0
    %v387 = vsub.f32 %v383, 1.0
    %v388 = vsub.f32 %v384, 1.0
    %v389 = vmul.f32 %v385, 7.5
    %v390 = vmul.f32 %v386, 7.5
    %v391 = vmul.f32 %v387, 7.5
    %v392 = vmul.f32 %v388, 7.5
    %v393 = vmul.f32 %v389, %v261
    %v394 = vmul.f32 %v390, %v262
    %v395 = vmul.f32 %v391, %v263
    %v396 = vmul.f32 %v392, %v264
    %v397 = vmul.f32 %v125, -105.0
    %v398 = vmul.f32 %v126, -105.0
    %v399 = vmul.f32 %v127, -105.0
    %v400 = vmul.f32 %v128, -105.0
    %v401 = vmul.f32 %v397, %v265
    %v402 = vmul.f32 %v398, %v266
    %v403 = vmul.f32 %v399, %v267
    %v404 = vmul.f32 %v400, %v268
    %v405 = vmul.f32 %v269, 105.0
    %v406 = vmul.f32 %v270, 105.0
    %v407 = vmul.f32 %v271, 105.0
    %v408 = vmul.f32 %v272, 105.0
    %v409 = vmul.f32 %v177, 0.48860252
    %v410 = vmul.f32 %v178, 0.48860252
    %v411 = vmul.f32 %v179, 0.48860252
    %v412 = vmul.f32 %v180, 0.48860252
    %v413 = vmul.f32 %v409, %v273
    %v414 = vmul.f32 %v410, %v274
    %v415 = vmul.f32 %v411, %v275
    %v416 = vmul.f32 %v412, %v276
    %v417 = vmul.f32 %v125, 0.48860252
    %v418 = vmul.f32 %v126, 0.48860252
    %v419 = vmul.f32 %v127, 0.48860252
    %v420 = vmul.f32 %v128, 0.48860252
    %v421 = vmul.f32 %v145, 0.48860252
    %v422 = vmul.f32 %v146, 0.48860252
    %v423 = vmul.f32 %v147, 0.48860252
    %v424 = vmul.f32 %v148, 0.48860252
    %v425 = vmul.f32 %v421, %v273
    %v426 = vmul.f32 %v422, %v274
    %v427 = vmul.f32 %v423, %v275
    %v428 = vmul.f32 %v424, %v276
    %v429 = vmul.f32 %v197, 0.1820914
    %v430 = vmul.f32 %v198, 0.1820914
    %v431 = vmul.f32 %v199, 0.1820914
    %v432 = vmul.f32 %v200, 0.1820914
    %v433 = vmul.f32 %v429, %v297
    %v434 = vmul.f32 %v430, %v298
    %v435 = vmul.f32 %v431, %v299
    %v436 = vmul.f32 %v432, %v300
    %v437 = vmul.f32 %v177, 0.3641828
    %v438 = vmul.f32 %v178, 0.3641828
    %v439 = vmul.f32 %v179, 0.3641828
    %v440 = vmul.f32 %v180, 0.3641828
    %v441 = vmul.f32 %v437, %v293
    %v442 = vmul.f32 %v438, %v294
    %v443 = vmul.f32 %v439, %v295
    %v444 = vmul.f32 %v440, %v296
    %v445 = vmul.f32 %v285, 0.63078314
    %v446 = vmul.f32 %v286, 0.63078314
    %v447 = vmul.f32 %v287, 0.63078314
    %v448 = vmul.f32 %v288, 0.63078314
    %v449 = vmul.f32 %v145, 0.3641828
    %v450 = vmul.f32 %v146, 0.3641828
    %v451 = vmul.f32 %v147, 0.3641828
    %v452 = vmul.f32 %v148, 0.3641828
    %v453 = vmul.f32 %v449, %v293
    %v454 = vmul.f32 %v450, %v294
    %v455 = vmul.f32 %v451, %v295
    %v456 = vmul.f32 %v452, %v296
    %v457 = vmul.f32 %v189, 0.1820914
    %v458 = vmul.f32 %v190, 0.1820914
    %v459 = vmul.f32 %v191, 0.1820914
    %v460 = vmul.f32 %v192, 0.1820914
    %v461 = vmul.f32 %v457, %v297
    %v462 = vmul.f32 %v458, %v298
    %v463 = vmul.f32 %v459, %v299
    %v464 = vmul.f32 %v460, %v300
    %v465 = vmul.f32 %v221, 0.039336238
    %v466 = vmul.f32 %v222, 0.039336238
    %v467 = vmul.f32 %v223, 0.039336238
    %v468 = vmul.f32 %v224, 0.039336238
    %v469 = vmul.f32 %v465, %v341
    %v470 = vmul.f32 %v466, %v342
    %v471 = vmul.f32 %v467, %v343
    %v472 = vmul.f32 %v468, %v344
    %v473 = vmul.f32 %v197, 0.09635372
    %v474 = vmul.f32 %v198, 0.09635372
    %v475 = vmul.f32 %v199, 0.09635372
    %v476 = vmul.f32 %v200, 0.09635372
    %v477 = vmul.f32 %v473, %v337
    %v478 = vmul.f32 %v474, %v338
    %v479 = vmul.f32 %v475, %v339
    %v480 = vmul.f32 %v476, %v340
    %v481 = vmul.f32 %v177, 0.3046972
    %v482 = vmul.f32 %v178, 0.3046972
    %v483 = vmul.f32 %v179, 0.3046972
    %v484 = vmul.f32 %v180, 0.3046972
    %v485 = vmul.f32 %v481, %v329
    %v486 = vmul.f32 %v482, %v330
    %v487 = vmul.f32 %v483, %v331
    %v488 = vmul.f32 %v484, %v332
    %v489 = vmul.f32 %v313, 0.7463527
    %v490 = vmul.f32 %v314, 0.7463527
    %v491 = vmul.f32 %v315, 0.7463527
    %v492 = vmul.f32 %v316, 0.7463527
    %v493 = vmul.f32 %v145, 0.3046972
    %v494 = vmul.f32 %v146, 0.3046972
    %v495 = vmul.f32 %v147, 0.3046972
    %v496 = vmul.f32 %v148, 0.3046972
    %v497 = vmul.f32 %v493, %v329
    %v498 = vmul.f32 %v494, %v330
    %v499 = vmul.f32 %v495, %v331
    %v500 = vmul.f32 %v496, %v332
    %v501 = vmul.f32 %v189, 0.09635372
    %v502 = vmul.f32 %v190, 0.09635372
    %v503 = vmul.f32 %v191, 0.09635372
    %v504 = vmul.f32 %v192, 0.09635372
    %v505 = vmul.f32 %v501, %v337
    %v506 = vmul.f32 %v502, %v338
    %v507 = vmul.f32 %v503, %v339
    %v508 = vmul.f32 %v504, %v340
    %v509 = vmul.f32 %v209, 0.039336238
    %v510 = vmul.f32 %v210, 0.039336238
    %v511 = vmul.f32 %v211, 0.039336238
    %v512 = vmul.f32 %v212, 0.039336238
    %v513 = vmul.f32 %v509, %v341
    %v514 = vmul.f32 %v510, %v342
    %v515 = vmul.f32 %v511, %v343
    %v516 = vmul.f32 %v512, %v344
    %v517 = vmul.f32 %v245, 0.00596034
    %v518 = vmul.f32 %v246, 0.00596034
    %v519 = vmul.f32 %v247, 0.00596034
    %v520 = vmul.f32 %v248, 0.00596034
    %v521 = vmul.f32 %v517, %v405
    %v522 = vmul.f32 %v518, %v406
    %v523 = vmul.f32 %v519, %v407
    %v524 = vmul.f32 %v520, %v408
    %v525 = vmul.f32 %v221, 0.016858388
    %v526 = vmul.f32 %v222, 0.016858388
    %v527 = vmul.f32 %v223, 0.016858388
    %v528 = vmul.f32 %v224, 0.016858388
    %v529 = vmul.f32 %v525, %v401
    %v530 = vmul.f32 %v526, %v402
    %v531 = vmul.f32 %v527, %v403
    %v532 = vmul.f32 %v528, %v404
    %v533 = vmul.f32 %v197, 0.063078314
    %v534 = vmul.f32 %v198, 0.063078314
    %v535 = vmul.f32 %v199, 0.063078314
    %v536 = vmul.f32 %v200, 0.063078314
    %v537 = vmul.f32 %v533, %v393
    %v538 = vmul.f32 %v534, %v394
    %v539 = vmul.f32 %v535, %v395
    %v540 = vmul.f32 %v536, %v396
    %v541 = vmul.f32 %v177, 0.26761863
    %v542 = vmul.f32 %v178, 0.26761863
    %v543 = vmul.f32 %v179, 0.26761863
    %v544 = vmul.f32 %v180, 0.26761863
    %v545 = vmul.f32 %v541, %v377
    %v546 = vmul.f32 %v542, %v378
    %v547 = vmul.f32 %v543, %v379
    %v548 = vmul.f32 %v544, %v380
    %v549 = vmul.f32 %v361, 0.8462844
    %v550 = vmul.f32 %v362, 0.8462844
    %v551 = vmul.f32 %v363, 0.8462844
    %v552 = vmul.f32 %v364, 0.8462844
    %v553 = vmul.f32 %v145, 0.26761863
    %v554 = vmul.f32 %v146, 0.26761863
    %v555 = vmul.f32 %v147, 0.26761863
    %v556 = vmul.f32 %v148, 0.26761863
    %v557 = vmul.f32 %v553, %v377
    %v558 = vmul.f32 %v554, %v378
    %v559 = vmul.f32 %v555, %v379
    %v560 = vmul.f32 %v556, %v380
    %v561 = vmul.f32 %v189, 0.063078314
    %v562 = vmul.f32 %v190, 0.063078314
    %v563 = vmul.f32 %v191, 0.063078314
    %v564 = vmul.f32 %v192, 0.063078314
    %v565 = vmul.f32 %v561, %v393
    %v566 = vmul.f32 %v562, %v394
    %v567 = vmul.f32 %v563, %v395
    %v568 = vmul.f32 %v564, %v396
    %v569 = vmul.f32 %v209, 0.016858388
    %v570 = vmul.f32 %v210, 0.016858388
    %v571 = vmul.f32 %v211, 0.016858388
    %v572 = vmul.f32 %v212, 0.016858388
    %v573 = vmul.f32 %v569, %v401
    %v574 = vmul.f32 %v570, %v402
    %v575 = vmul.f32 %v571, %v403
    %v576 = vmul.f32 %v572, %v404
    %v577 = vmul.f32 %v233, 0.00596034
    %v578 = vmul.f32 %v234, 0.00596034
    %v579 = vmul.f32 %v235, 0.00596034
    %v580 = vmul.f32 %v236, 0.00596034
    %v581 = vmul.f32 %v577, %v405
    %v582 = vmul.f32 %v578, %v406
    %v583 = vmul.f32 %v579, %v407
    %v584 = vmul.f32 %v580, %v408
    %v585 = vlaneseq
    %vm586 = vcmp.ge.s32.totalorder %v585, 0
    %vm587 = vcmp.lt.s32.totalorder %v585, 512
    %vm588 = vmand %vm586, %vm587
    %589 = vst.msk [vmem:[#allocation5] ss:$8 sm:$0xf] %vm588, 0.2820948
    %590 = vst.msk [vmem:[#allocation5] ss:$8 sm:$0x0] %vm588, 0.2820948
    %v595 = vcombine.low %v413, %v414
    %v596 = vcombine.low %v415, %v416
    %v598 = vunpack.c.l.s4 1966171168
    %v599 = vunpack.c.0.s8 %v598
    %v600 = vlaneseq
    %v601 = vshrl.u32 %v600, 7
    %v602 = vsub.s32 %v599, %v601
    %v603 = vrot.slane %v595, %v602
    %v605 = vunpack.c.l.s4 1966171168
    %v606 = vunpack.c.0.s8 %v605
    %v607 = vlaneseq
    %v608 = vshrl.u32 %v607, 7
    %v609 = vsub.s32 %v606, %v608
    %v610 = vrot.slane %v596, %v609
    %v611 = vcombine.high %v603, %v610
    %v613 = vunpack.c.l.s4 1966171168
    %v614 = vunpack.c.0.s8 %v613
    %v615 = vlaneseq
    %v616 = vshrl.u32 %v615, 7
    %v617 = vsub.s32 %v614, %v616
    %v618 = vrot.slane %v611, %v617
    %s620 = scalar_lea.vmem [#allocation5], 1
    %621 = vst.msk [vmem:[%s620] ss:$8 sm:$0xf] %vm588, %v618
    %622 = vst.msk [vmem:[%s620] ss:$8 sm:$0x0] %vm588, %v618
    %v627 = vcombine.low %v417, %v418
    %v628 = vcombine.low %v419, %v420
    %v630 = vunpack.c.l.s4 1966171168
    %v631 = vunpack.c.0.s8 %v630
    %v632 = vlaneseq
    %v633 = vshrl.u32 %v632, 7
    %v634 = vsub.s32 %v631, %v633
    %v635 = vrot.slane %v627, %v634
    %v637 = vunpack.c.l.s4 1966171168
    %v638 = vunpack.c.0.s8 %v637
    %v639 = vlaneseq
    %v640 = vshrl.u32 %v639, 7
    %v641 = vsub.s32 %v638, %v640
    %v642 = vrot.slane %v628, %v641
    %v643 = vcombine.high %v635, %v642
    %v645 = vunpack.c.l.s4 1966171168
    %v646 = vunpack.c.0.s8 %v645
    %v647 = vlaneseq
    %v648 = vshrl.u32 %v647, 7
    %v649 = vsub.s32 %v646, %v648
    %v650 = vrot.slane %v643, %v649
    %s652 = scalar_lea.vmem [#allocation5], 2
    %653 = vst.msk [vmem:[%s652] ss:$8 sm:$0xf] %vm588, %v650
    %654 = vst.msk [vmem:[%s652] ss:$8 sm:$0x0] %vm588, %v650
    %v659 = vcombine.low %v425, %v426
    %v660 = vcombine.low %v427, %v428
    %v662 = vunpack.c.l.s4 1966171168
    %v663 = vunpack.c.0.s8 %v662
    %v664 = vlaneseq
    %v665 = vshrl.u32 %v664, 7
    %v666 = vsub.s32 %v663, %v665
    %v667 = vrot.slane %v659, %v666
    %v669 = vunpack.c.l.s4 1966171168
    %v670 = vunpack.c.0.s8 %v669
    %v671 = vlaneseq
    %v672 = vshrl.u32 %v671, 7
    %v673 = vsub.s32 %v670, %v672
    %v674 = vrot.slane %v660, %v673
    %v675 = vcombine.high %v667, %v674
    %v677 = vunpack.c.l.s4 1966171168
    %v678 = vunpack.c.0.s8 %v677
    %v679 = vlaneseq
    %v680 = vshrl.u32 %v679, 7
    %v681 = vsub.s32 %v678, %v680
    %v682 = vrot.slane %v675, %v681
    %s684 = scalar_lea.vmem [#allocation5], 3
    %685 = vst.msk [vmem:[%s684] ss:$8 sm:$0xf] %vm588, %v682
    %686 = vst.msk [vmem:[%s684] ss:$8 sm:$0x0] %vm588, %v682
    %v691 = vcombine.low %v433, %v434
    %v692 = vcombine.low %v435, %v436
    %v694 = vunpack.c.l.s4 1966171168
    %v695 = vunpack.c.0.s8 %v694
    %v696 = vlaneseq
    %v697 = vshrl.u32 %v696, 7
    %v698 = vsub.s32 %v695, %v697
    %v699 = vrot.slane %v691, %v698
    %v701 = vunpack.c.l.s4 1966171168
    %v702 = vunpack.c.0.s8 %v701
    %v703 = vlaneseq
    %v704 = vshrl.u32 %v703, 7
    %v705 = vsub.s32 %v702, %v704
    %v706 = vrot.slane %v692, %v705
    %v707 = vcombine.high %v699, %v706
    %v709 = vunpack.c.l.s4 1966171168
    %v710 = vunpack.c.0.s8 %v709
    %v711 = vlaneseq
    %v712 = vshrl.u32 %v711, 7
    %v713 = vsub.s32 %v710, %v712
    %v714 = vrot.slane %v707, %v713
    %s716 = scalar_lea.vmem [#allocation5], 4
    %717 = vst.msk [vmem:[%s716] ss:$8 sm:$0xf] %vm588, %v714
    %718 = vst.msk [vmem:[%s716] ss:$8 sm:$0x0] %vm588, %v714
    %v723 = vcombine.low %v441, %v442
    %v724 = vcombine.low %v443, %v444
    %v726 = vunpack.c.l.s4 1966171168
    %v727 = vunpack.c.0.s8 %v726
    %v728 = vlaneseq
    %v729 = vshrl.u32 %v728, 7
    %v730 = vsub.s32 %v727, %v729
    %v731 = vrot.slane %v723, %v730
    %v733 = vunpack.c.l.s4 1966171168
    %v734 = vunpack.c.0.s8 %v733
    %v735 = vlaneseq
    %v736 = vshrl.u32 %v735, 7
    %v737 = vsub.s32 %v734, %v736
    %v738 = vrot.slane %v724, %v737
    %v739 = vcombine.high %v731, %v738
    %v741 = vunpack.c.l.s4 1966171168
    %v742 = vunpack.c.0.s8 %v741
    %v743 = vlaneseq
    %v744 = vshrl.u32 %v743, 7
    %v745 = vsub.s32 %v742, %v744
    %v746 = vrot.slane %v739, %v745
    %s748 = scalar_lea.vmem [#allocation5], 5
    %749 = vst.msk [vmem:[%s748] ss:$8 sm:$0xf] %vm588, %v746
    %750 = vst.msk [vmem:[%s748] ss:$8 sm:$0x0] %vm588, %v746
    %v755 = vcombine.low %v445, %v446
    %v756 = vcombine.low %v447, %v448
    %v758 = vunpack.c.l.s4 1966171168
    %v759 = vunpack.c.0.s8 %v758
    %v760 = vlaneseq
    %v761 = vshrl.u32 %v760, 7
    %v762 = vsub.s32 %v759, %v761
    %v763 = vrot.slane %v755, %v762
    %v765 = vunpack.c.l.s4 1966171168
    %v766 = vunpack.c.0.s8 %v765
    %v767 = vlaneseq
    %v768 = vshrl.u32 %v767, 7
    %v769 = vsub.s32 %v766, %v768
    %v770 = vrot.slane %v756, %v769
    %v771 = vcombine.high %v763, %v770
    %v773 = vunpack.c.l.s4 1966171168
    %v774 = vunpack.c.0.s8 %v773
    %v775 = vlaneseq
    %v776 = vshrl.u32 %v775, 7
    %v777 = vsub.s32 %v774, %v776
    %v778 = vrot.slane %v771, %v777
    %s780 = scalar_lea.vmem [#allocation5], 6
    %781 = vst.msk [vmem:[%s780] ss:$8 sm:$0xf] %vm588, %v778
    %782 = vst.msk [vmem:[%s780] ss:$8 sm:$0x0] %vm588, %v778
    %v787 = vcombine.low %v453, %v454
    %v788 = vcombine.low %v455, %v456
    %v790 = vunpack.c.l.s4 1966171168
    %v791 = vunpack.c.0.s8 %v790
    %v792 = vlaneseq
    %v793 = vshrl.u32 %v792, 7
    %v794 = vsub.s32 %v791, %v793
    %v795 = vrot.slane %v787, %v794
    %v797 = vunpack.c.l.s4 1966171168
    %v798 = vunpack.c.0.s8 %v797
    %v799 = vlaneseq
    %v800 = vshrl.u32 %v799, 7
    %v801 = vsub.s32 %v798, %v800
    %v802 = vrot.slane %v788, %v801
    %v803 = vcombine.high %v795, %v802
    %v805 = vunpack.c.l.s4 1966171168
    %v806 = vunpack.c.0.s8 %v805
    %v807 = vlaneseq
    %v808 = vshrl.u32 %v807, 7
    %v809 = vsub.s32 %v806, %v808
    %v810 = vrot.slane %v803, %v809
    %s812 = scalar_lea.vmem [#allocation5], 7
    %813 = vst.msk [vmem:[%s812] ss:$8 sm:$0xf] %vm588, %v810
    %814 = vst.msk [vmem:[%s812] ss:$8 sm:$0x0] %vm588, %v810
    %v819 = vcombine.low %v461, %v462
    %v820 = vcombine.low %v463, %v464
    %v822 = vunpack.c.l.s4 1966171168
    %v823 = vunpack.c.0.s8 %v822
    %v824 = vlaneseq
    %v825 = vshrl.u32 %v824, 7
    %v826 = vsub.s32 %v823, %v825
    %v827 = vrot.slane %v819, %v826
    %v829 = vunpack.c.l.s4 1966171168
    %v830 = vunpack.c.0.s8 %v829
    %v831 = vlaneseq
    %v832 = vshrl.u32 %v831, 7
    %v833 = vsub.s32 %v830, %v832
    %v834 = vrot.slane %v820, %v833
    %v835 = vcombine.high %v827, %v834
    %v837 = vunpack.c.l.s4 1966171168
    %v838 = vunpack.c.0.s8 %v837
    %v839 = vlaneseq
    %v840 = vshrl.u32 %v839, 7
    %v841 = vsub.s32 %v838, %v840
    %v842 = vrot.slane %v835, %v841
    %s844 = scalar_lea.vmem [#allocation5], 32
    %845 = vst.msk [vmem:[%s844] ss:$8 sm:$0xf] %vm588, %v842
    %846 = vst.msk [vmem:[%s844] ss:$8 sm:$0x0] %vm588, %v842
    %v851 = vcombine.low %v469, %v470
    %v852 = vcombine.low %v471, %v472
    %v854 = vunpack.c.l.s4 1966171168
    %v855 = vunpack.c.0.s8 %v854
    %v856 = vlaneseq
    %v857 = vshrl.u32 %v856, 7
    %v858 = vsub.s32 %v855, %v857
    %v859 = vrot.slane %v851, %v858
    %v861 = vunpack.c.l.s4 1966171168
    %v862 = vunpack.c.0.s8 %v861
    %v863 = vlaneseq
    %v864 = vshrl.u32 %v863, 7
    %v865 = vsub.s32 %v862, %v864
    %v866 = vrot.slane %v852, %v865
    %v867 = vcombine.high %v859, %v866
    %v869 = vunpack.c.l.s4 1966171168
    %v870 = vunpack.c.0.s8 %v869
    %v871 = vlaneseq
    %v872 = vshrl.u32 %v871, 7
    %v873 = vsub.s32 %v870, %v872
    %v874 = vrot.slane %v867, %v873
    %s876 = scalar_lea.vmem [#allocation5], 33
    %877 = vst.msk [vmem:[%s876] ss:$8 sm:$0xf] %vm588, %v874
    %878 = vst.msk [vmem:[%s876] ss:$8 sm:$0x0] %vm588, %v874
    %v883 = vcombine.low %v477, %v478
    %v884 = vcombine.low %v479, %v480
    %v886 = vunpack.c.l.s4 1966171168
    %v887 = vunpack.c.0.s8 %v886
    %v888 = vlaneseq
    %v889 = vshrl.u32 %v888, 7
    %v890 = vsub.s32 %v887, %v889
    %v891 = vrot.slane %v883, %v890
    %v893 = vunpack.c.l.s4 1966171168
    %v894 = vunpack.c.0.s8 %v893
    %v895 = vlaneseq
    %v896 = vshrl.u32 %v895, 7
    %v897 = vsub.s32 %v894, %v896
    %v898 = vrot.slane %v884, %v897
    %v899 = vcombine.high %v891, %v898
    %v901 = vunpack.c.l.s4 1966171168
    %v902 = vunpack.c.0.s8 %v901
    %v903 = vlaneseq
    %v904 = vshrl.u32 %v903, 7
    %v905 = vsub.s32 %v902, %v904
    %v906 = vrot.slane %v899, %v905
    %s908 = scalar_lea.vmem [#allocation5], 34
    %909 = vst.msk [vmem:[%s908] ss:$8 sm:$0xf] %vm588, %v906
    %910 = vst.msk [vmem:[%s908] ss:$8 sm:$0x0] %vm588, %v906
    %v915 = vcombine.low %v485, %v486
    %v916 = vcombine.low %v487, %v488
    %v918 = vunpack.c.l.s4 1966171168
    %v919 = vunpack.c.0.s8 %v918
    %v920 = vlaneseq
    %v921 = vshrl.u32 %v920, 7
    %v922 = vsub.s32 %v919, %v921
    %v923 = vrot.slane %v915, %v922
    %v925 = vunpack.c.l.s4 1966171168
    %v926 = vunpack.c.0.s8 %v925
    %v927 = vlaneseq
    %v928 = vshrl.u32 %v927, 7
    %v929 = vsub.s32 %v926, %v928
    %v930 = vrot.slane %v916, %v929
    %v931 = vcombine.high %v923, %v930
    %v933 = vunpack.c.l.s4 1966171168
    %v934 = vunpack.c.0.s8 %v933
    %v935 = vlaneseq
    %v936 = vshrl.u32 %v935, 7
    %v937 = vsub.s32 %v934, %v936
    %v938 = vrot.slane %v931, %v937
    %s940 = scalar_lea.vmem [#allocation5], 35
    %941 = vst.msk [vmem:[%s940] ss:$8 sm:$0xf] %vm588, %v938
    %942 = vst.msk [vmem:[%s940] ss:$8 sm:$0x0] %vm588, %v938
    %v947 = vcombine.low %v489, %v490
    %v948 = vcombine.low %v491, %v492
    %v950 = vunpack.c.l.s4 1966171168
    %v951 = vunpack.c.0.s8 %v950
    %v952 = vlaneseq
    %v953 = vshrl.u32 %v952, 7
    %v954 = vsub.s32 %v951, %v953
    %v955 = vrot.slane %v947, %v954
    %v957 = vunpack.c.l.s4 1966171168
    %v958 = vunpack.c.0.s8 %v957
    %v959 = vlaneseq
    %v960 = vshrl.u32 %v959, 7
    %v961 = vsub.s32 %v958, %v960
    %v962 = vrot.slane %v948, %v961
    %v963 = vcombine.high %v955, %v962
    %v965 = vunpack.c.l.s4 1966171168
    %v966 = vunpack.c.0.s8 %v965
    %v967 = vlaneseq
    %v968 = vshrl.u32 %v967, 7
    %v969 = vsub.s32 %v966, %v968
    %v970 = vrot.slane %v963, %v969
    %s972 = scalar_lea.vmem [#allocation5], 36
    %973 = vst.msk [vmem:[%s972] ss:$8 sm:$0xf] %vm588, %v970
    %974 = vst.msk [vmem:[%s972] ss:$8 sm:$0x0] %vm588, %v970
    %v979 = vcombine.low %v497, %v498
    %v980 = vcombine.low %v499, %v500
    %v982 = vunpack.c.l.s4 1966171168
    %v983 = vunpack.c.0.s8 %v982
    %v984 = vlaneseq
    %v985 = vshrl.u32 %v984, 7
    %v986 = vsub.s32 %v983, %v985
    %v987 = vrot.slane %v979, %v986
    %v989 = vunpack.c.l.s4 1966171168
    %v990 = vunpack.c.0.s8 %v989
    %v991 = vlaneseq
    %v992 = vshrl.u32 %v991, 7
    %v993 = vsub.s32 %v990, %v992
    %v994 = vrot.slane %v980, %v993
    %v995 = vcombine.high %v987, %v994
    %v997 = vunpack.c.l.s4 1966171168
    %v998 = vunpack.c.0.s8 %v997
    %v999 = vlaneseq
    %v1000 = vshrl.u32 %v999, 7
    %v1001 = vsub.s32 %v998, %v1000
    %v1002 = vrot.slane %v995, %v1001
    %s1004 = scalar_lea.vmem [#allocation5], 37
    %1005 = vst.msk [vmem:[%s1004] ss:$8 sm:$0xf] %vm588, %v1002
    %1006 = vst.msk [vmem:[%s1004] ss:$8 sm:$0x0] %vm588, %v1002
    %v1011 = vcombine.low %v505, %v506
    %v1012 = vcombine.low %v507, %v508
    %v1014 = vunpack.c.l.s4 1966171168
    %v1015 = vunpack.c.0.s8 %v1014
    %v1016 = vlaneseq
    %v1017 = vshrl.u32 %v1016, 7
    %v1018 = vsub.s32 %v1015, %v1017
    %v1019 = vrot.slane %v1011, %v1018
    %v1021 = vunpack.c.l.s4 1966171168
    %v1022 = vunpack.c.0.s8 %v1021
    %v1023 = vlaneseq
    %v1024 = vshrl.u32 %v1023, 7
    %v1025 = vsub.s32 %v1022, %v1024
    %v1026 = vrot.slane %v1012, %v1025
    %v1027 = vcombine.high %v1019, %v1026
    %v1029 = vunpack.c.l.s4 1966171168
    %v1030 = vunpack.c.0.s8 %v1029
    %v1031 = vlaneseq
    %v1032 = vshrl.u32 %v1031, 7
    %v1033 = vsub.s32 %v1030, %v1032
    %v1034 = vrot.slane %v1027, %v1033
    %s1036 = scalar_lea.vmem [#allocation5], 38
    %1037 = vst.msk [vmem:[%s1036] ss:$8 sm:$0xf] %vm588, %v1034
    %1038 = vst.msk [vmem:[%s1036] ss:$8 sm:$0x0] %vm588, %v1034
    %v1043 = vcombine.low %v513, %v514
    %v1044 = vcombine.low %v515, %v516
    %v1046 = vunpack.c.l.s4 1966171168
    %v1047 = vunpack.c.0.s8 %v1046
    %v1048 = vlaneseq
    %v1049 = vshrl.u32 %v1048, 7
    %v1050 = vsub.s32 %v1047, %v1049
    %v1051 = vrot.slane %v1043, %v1050
    %v1053 = vunpack.c.l.s4 1966171168
    %v1054 = vunpack.c.0.s8 %v1053
    %v1055 = vlaneseq
    %v1056 = vshrl.u32 %v1055, 7
    %v1057 = vsub.s32 %v1054, %v1056
    %v1058 = vrot.slane %v1044, %v1057
    %v1059 = vcombine.high %v1051, %v1058
    %v1061 = vunpack.c.l.s4 1966171168
    %v1062 = vunpack.c.0.s8 %v1061
    %v1063 = vlaneseq
    %v1064 = vshrl.u32 %v1063, 7
    %v1065 = vsub.s32 %v1062, %v1064
    %v1066 = vrot.slane %v1059, %v1065
    %s1068 = scalar_lea.vmem [#allocation5], 39
    %1069 = vst.msk [vmem:[%s1068] ss:$8 sm:$0xf] %vm588, %v1066
    %1070 = vst.msk [vmem:[%s1068] ss:$8 sm:$0x0] %vm588, %v1066
    %v1075 = vcombine.low %v521, %v522
    %v1076 = vcombine.low %v523, %v524
    %v1078 = vunpack.c.l.s4 1966171168
    %v1079 = vunpack.c.0.s8 %v1078
    %v1080 = vlaneseq
    %v1081 = vshrl.u32 %v1080, 7
    %v1082 = vsub.s32 %v1079, %v1081
    %v1083 = vrot.slane %v1075, %v1082
    %v1085 = vunpack.c.l.s4 1966171168
    %v1086 = vunpack.c.0.s8 %v1085
    %v1087 = vlaneseq
    %v1088 = vshrl.u32 %v1087, 7
    %v1089 = vsub.s32 %v1086, %v1088
    %v1090 = vrot.slane %v1076, %v1089
    %v1091 = vcombine.high %v1083, %v1090
    %v1093 = vunpack.c.l.s4 1966171168
    %v1094 = vunpack.c.0.s8 %v1093
    %v1095 = vlaneseq
    %v1096 = vshrl.u32 %v1095, 7
    %v1097 = vsub.s32 %v1094, %v1096
    %v1098 = vrot.slane %v1091, %v1097
    %s1100 = scalar_lea.vmem [#allocation5], 64
    %1101 = vst.msk [vmem:[%s1100] ss:$8 sm:$0xf] %vm588, %v1098
    %1102 = vst.msk [vmem:[%s1100] ss:$8 sm:$0x0] %vm588, %v1098
    %v1107 = vcombine.low %v529, %v530
    %v1108 = vcombine.low %v531, %v532
    %v1110 = vunpack.c.l.s4 1966171168
    %v1111 = vunpack.c.0.s8 %v1110
    %v1112 = vlaneseq
    %v1113 = vshrl.u32 %v1112, 7
    %v1114 = vsub.s32 %v1111, %v1113
    %v1115 = vrot.slane %v1107, %v1114
    %v1117 = vunpack.c.l.s4 1966171168
    %v1118 = vunpack.c.0.s8 %v1117
    %v1119 = vlaneseq
    %v1120 = vshrl.u32 %v1119, 7
    %v1121 = vsub.s32 %v1118, %v1120
    %v1122 = vrot.slane %v1108, %v1121
    %v1123 = vcombine.high %v1115, %v1122
    %v1125 = vunpack.c.l.s4 1966171168
    %v1126 = vunpack.c.0.s8 %v1125
    %v1127 = vlaneseq
    %v1128 = vshrl.u32 %v1127, 7
    %v1129 = vsub.s32 %v1126, %v1128
    %v1130 = vrot.slane %v1123, %v1129
    %s1132 = scalar_lea.vmem [#allocation5], 65
    %1133 = vst.msk [vmem:[%s1132] ss:$8 sm:$0xf] %vm588, %v1130
    %1134 = vst.msk [vmem:[%s1132] ss:$8 sm:$0x0] %vm588, %v1130
    %v1139 = vcombine.low %v537, %v538
    %v1140 = vcombine.low %v539, %v540
    %v1142 = vunpack.c.l.s4 1966171168
    %v1143 = vunpack.c.0.s8 %v1142
    %v1144 = vlaneseq
    %v1145 = vshrl.u32 %v1144, 7
    %v1146 = vsub.s32 %v1143, %v1145
    %v1147 = vrot.slane %v1139, %v1146
    %v1149 = vunpack.c.l.s4 1966171168
    %v1150 = vunpack.c.0.s8 %v1149
    %v1151 = vlaneseq
    %v1152 = vshrl.u32 %v1151, 7
    %v1153 = vsub.s32 %v1150, %v1152
    %v1154 = vrot.slane %v1140, %v1153
    %v1155 = vcombine.high %v1147, %v1154
    %v1157 = vunpack.c.l.s4 1966171168
    %v1158 = vunpack.c.0.s8 %v1157
    %v1159 = vlaneseq
    %v1160 = vshrl.u32 %v1159, 7
    %v1161 = vsub.s32 %v1158, %v1160
    %v1162 = vrot.slane %v1155, %v1161
    %s1164 = scalar_lea.vmem [#allocation5], 66
    %1165 = vst.msk [vmem:[%s1164] ss:$8 sm:$0xf] %vm588, %v1162
    %1166 = vst.msk [vmem:[%s1164] ss:$8 sm:$0x0] %vm588, %v1162
    %v1171 = vcombine.low %v545, %v546
    %v1172 = vcombine.low %v547, %v548
    %v1174 = vunpack.c.l.s4 1966171168
    %v1175 = vunpack.c.0.s8 %v1174
    %v1176 = vlaneseq
    %v1177 = vshrl.u32 %v1176, 7
    %v1178 = vsub.s32 %v1175, %v1177
    %v1179 = vrot.slane %v1171, %v1178
    %v1181 = vunpack.c.l.s4 1966171168
    %v1182 = vunpack.c.0.s8 %v1181
    %v1183 = vlaneseq
    %v1184 = vshrl.u32 %v1183, 7
    %v1185 = vsub.s32 %v1182, %v1184
    %v1186 = vrot.slane %v1172, %v1185
    %v1187 = vcombine.high %v1179, %v1186
    %v1189 = vunpack.c.l.s4 1966171168
    %v1190 = vunpack.c.0.s8 %v1189
    %v1191 = vlaneseq
    %v1192 = vshrl.u32 %v1191, 7
    %v1193 = vsub.s32 %v1190, %v1192
    %v1194 = vrot.slane %v1187, %v1193
    %s1196 = scalar_lea.vmem [#allocation5], 67
    %1197 = vst.msk [vmem:[%s1196] ss:$8 sm:$0xf] %vm588, %v1194
    %1198 = vst.msk [vmem:[%s1196] ss:$8 sm:$0x0] %vm588, %v1194
    %v1203 = vcombine.low %v549, %v550
    %v1204 = vcombine.low %v551, %v552
    %v1206 = vunpack.c.l.s4 1966171168
    %v1207 = vunpack.c.0.s8 %v1206
    %v1208 = vlaneseq
    %v1209 = vshrl.u32 %v1208, 7
    %v1210 = vsub.s32 %v1207, %v1209
    %v1211 = vrot.slane %v1203, %v1210
    %v1213 = vunpack.c.l.s4 1966171168
    %v1214 = vunpack.c.0.s8 %v1213
    %v1215 = vlaneseq
    %v1216 = vshrl.u32 %v1215, 7
    %v1217 = vsub.s32 %v1214, %v1216
    %v1218 = vrot.slane %v1204, %v1217
    %v1219 = vcombine.high %v1211, %v1218
    %v1221 = vunpack.c.l.s4 1966171168
    %v1222 = vunpack.c.0.s8 %v1221
    %v1223 = vlaneseq
    %v1224 = vshrl.u32 %v1223, 7
    %v1225 = vsub.s32 %v1222, %v1224
    %v1226 = vrot.slane %v1219, %v1225
    %s1228 = scalar_lea.vmem [#allocation5], 68
    %1229 = vst.msk [vmem:[%s1228] ss:$8 sm:$0xf] %vm588, %v1226
    %1230 = vst.msk [vmem:[%s1228] ss:$8 sm:$0x0] %vm588, %v1226
    %v1235 = vcombine.low %v557, %v558
    %v1236 = vcombine.low %v559, %v560
    %v1238 = vunpack.c.l.s4 1966171168
    %v1239 = vunpack.c.0.s8 %v1238
    %v1240 = vlaneseq
    %v1241 = vshrl.u32 %v1240, 7
    %v1242 = vsub.s32 %v1239, %v1241
    %v1243 = vrot.slane %v1235, %v1242
    %v1245 = vunpack.c.l.s4 1966171168
    %v1246 = vunpack.c.0.s8 %v1245
    %v1247 = vlaneseq
    %v1248 = vshrl.u32 %v1247, 7
    %v1249 = vsub.s32 %v1246, %v1248
    %v1250 = vrot.slane %v1236, %v1249
    %v1251 = vcombine.high %v1243, %v1250
    %v1253 = vunpack.c.l.s4 1966171168
    %v1254 = vunpack.c.0.s8 %v1253
    %v1255 = vlaneseq
    %v1256 = vshrl.u32 %v1255, 7
    %v1257 = vsub.s32 %v1254, %v1256
    %v1258 = vrot.slane %v1251, %v1257
    %s1260 = scalar_lea.vmem [#allocation5], 69
    %1261 = vst.msk [vmem:[%s1260] ss:$8 sm:$0xf] %vm588, %v1258
    %1262 = vst.msk [vmem:[%s1260] ss:$8 sm:$0x0] %vm588, %v1258
    %v1267 = vcombine.low %v565, %v566
    %v1268 = vcombine.low %v567, %v568
    %v1270 = vunpack.c.l.s4 1966171168
    %v1271 = vunpack.c.0.s8 %v1270
    %v1272 = vlaneseq
    %v1273 = vshrl.u32 %v1272, 7
    %v1274 = vsub.s32 %v1271, %v1273
    %v1275 = vrot.slane %v1267, %v1274
    %v1277 = vunpack.c.l.s4 1966171168
    %v1278 = vunpack.c.0.s8 %v1277
    %v1279 = vlaneseq
    %v1280 = vshrl.u32 %v1279, 7
    %v1281 = vsub.s32 %v1278, %v1280
    %v1282 = vrot.slane %v1268, %v1281
    %v1283 = vcombine.high %v1275, %v1282
    %v1285 = vunpack.c.l.s4 1966171168
    %v1286 = vunpack.c.0.s8 %v1285
    %v1287 = vlaneseq
    %v1288 = vshrl.u32 %v1287, 7
    %v1289 = vsub.s32 %v1286, %v1288
    %v1290 = vrot.slane %v1283, %v1289
    %s1292 = scalar_lea.vmem [#allocation5], 70
    %1293 = vst.msk [vmem:[%s1292] ss:$8 sm:$0xf] %vm588, %v1290
    %1294 = vst.msk [vmem:[%s1292] ss:$8 sm:$0x0] %vm588, %v1290
    %v1299 = vcombine.low %v573, %v574
    %v1300 = vcombine.low %v575, %v576
    %v1302 = vunpack.c.l.s4 1966171168
    %v1303 = vunpack.c.0.s8 %v1302
    %v1304 = vlaneseq
    %v1305 = vshrl.u32 %v1304, 7
    %v1306 = vsub.s32 %v1303, %v1305
    %v1307 = vrot.slane %v1299, %v1306
    %v1309 = vunpack.c.l.s4 1966171168
    %v1310 = vunpack.c.0.s8 %v1309
    %v1311 = vlaneseq
    %v1312 = vshrl.u32 %v1311, 7
    %v1313 = vsub.s32 %v1310, %v1312
    %v1314 = vrot.slane %v1300, %v1313
    %v1315 = vcombine.high %v1307, %v1314
    %v1317 = vunpack.c.l.s4 1966171168
    %v1318 = vunpack.c.0.s8 %v1317
    %v1319 = vlaneseq
    %v1320 = vshrl.u32 %v1319, 7
    %v1321 = vsub.s32 %v1318, %v1320
    %v1322 = vrot.slane %v1315, %v1321
    %s1324 = scalar_lea.vmem [#allocation5], 71
    %1325 = vst.msk [vmem:[%s1324] ss:$8 sm:$0xf] %vm588, %v1322
    %1326 = vst.msk [vmem:[%s1324] ss:$8 sm:$0x0] %vm588, %v1322
    %v1331 = vcombine.low %v581, %v582
    %v1332 = vcombine.low %v583, %v584
    %v1334 = vunpack.c.l.s4 1966171168
    %v1335 = vunpack.c.0.s8 %v1334
    %v1336 = vlaneseq
    %v1337 = vshrl.u32 %v1336, 7
    %v1338 = vsub.s32 %v1335, %v1337
    %v1339 = vrot.slane %v1331, %v1338
    %v1341 = vunpack.c.l.s4 1966171168
    %v1342 = vunpack.c.0.s8 %v1341
    %v1343 = vlaneseq
    %v1344 = vshrl.u32 %v1343, 7
    %v1345 = vsub.s32 %v1342, %v1344
    %v1346 = vrot.slane %v1332, %v1345
    %v1347 = vcombine.high %v1339, %v1346
    %v1349 = vunpack.c.l.s4 1966171168
    %v1350 = vunpack.c.0.s8 %v1349
    %v1351 = vlaneseq
    %v1352 = vshrl.u32 %v1351, 7
    %v1353 = vsub.s32 %v1350, %v1352
    %v1354 = vrot.slane %v1347, %v1353
    %s1356 = scalar_lea.vmem [#allocation5], 96
    %1357 = vst.msk [vmem:[%s1356] ss:$8 sm:$0xf] %vm588, %v1354
    %1358 = vst.msk [vmem:[%s1356] ss:$8 sm:$0x0] %vm588, %v1354
    // Predicated region
    $region10: #{tpu_custom_call.1} parent=1 // pred_check
      _
    $region11: #{tpu_custom_call.1} parent=1 // pred_check_branch
      %1360 = sbr.rel (0) target = $region13
    $region12: #{tpu_custom_call.1} parent=1 // pred_region
      %s1362 = ssub.s32 2048, 2048
      %1363 = vsyncadd [#allocation4], %s1362
      %s1364 = sshll.u32 [#allocation5], 4
      %s1365 = int_to_ptr.vmem [resolvable:$true] %s1364
      %1370 = dma.vmem_to_hbm [thread:$0]  %s1365, 2048, %s1, [#allocation4], 512, 512, 32
    $region13: #{tpu_custom_call.1} parent=1 // pred_fallthru
      _
    // Predicated region
    $region14: #{tpu_custom_call.1} parent=1 // pred_check
      _
    $region15: #{tpu_custom_call.1} parent=1 // pred_check_branch
      %1372 = sbr.rel (0) target = $region17
    $region16: #{tpu_custom_call.1} parent=1 // pred_region
      %1373 = dma.done [#allocation4], 2048
    $region17: #{tpu_custom_call.1} parent=1 // pred_fallthru
      _
    %1374 = vsyncpa [#allocation3], 1
    %1375 = vsyncpa [#allocation4], 1

</llo_original>
